<compile_context>
chip_gen: v7x
topology: tpu7x:2x2x1
jax: 0.10.0
libtpu: 0.0.40
codegen_flags: <defaults>
</compile_context>

<pallas_src>
import jax
import jax.numpy as jnp
import numpy as np
from jax import lax
from jax.experimental import pallas as pl
from jax.experimental.pallas import tpu as pltpu

NUM_HEADS = 2
LN_EPS = 1e-5


# ---------------------------------------------------------------------------
# Fused kernel: all layers for ONE batch element (one grid step).
# ---------------------------------------------------------------------------
def _fused_model_kernel(
    x_ref,      # (N, E)                 keys/values for layer 0 (this batch element)
    q_ref,      # (Hq, E)                queries / learnable axes (residual term)
    qp_ref,     # (L, NUM_HEADS*Hq, E)   pre-scaled queries, both heads stacked on sublanes
    wkvT_ref,   # (L, E, 2E)             [Wk^T | Wv^T]
    woT_ref,    # (L, NUM_HEADS*E, E)    head-masked Wo^T blocks stacked on contraction axis
    vecs_ref,   # (L, 4, 2E)             row0=[bk|bv], row1=[bo|0], row2=[gamma|0], row3=[beta|0]
    out_ref,    # (1, Hq, E)             final-layer output block
    *attn_refs,  # per layer: (1, Hq, seq_l) head-averaged attention weights
):
    N, E = x_ref.shape
    Hq = q_ref.shape[0]
    L = wkvT_ref.shape[0]

    queries = q_ref[...]                     # (Hq, E)
    kv = x_ref[...]                          # (N, E) — stays resident across layers

    for l in range(L):                       # static unroll over layers
        # ---- fused K|V projection: ONE (seq, E) x (E, 2E) MXU matmul ----------
        kvp = jnp.dot(kv, wkvT_ref[l], preferred_element_type=jnp.float32)
        kvp = kvp + vecs_ref[l, 0:1, :]      # + [bk | bv]
        K = kvp[:, :E]                       # (seq, E)
        V = kvp[:, E:]                       # (seq, E)

        # ---- head-stacked scores: ONE matmul for both heads -------------------
        # qp_ref[l] is pre-scaled and zero-masked outside each head's columns, so the
        # full-E contraction equals per-head Qh @ Kh^T with no kernel-side K slicing.
        S = lax.dot_general(qp_ref[l], K, (((1,), (1,)), ((), ())),
                            preferred_element_type=jnp.float32)   # (2*Hq, seq)
        S = S - jnp.max(S, axis=-1, keepdims=True)
        P = jnp.exp(S)
        denom = jnp.sum(P, axis=-1, keepdims=True)
        r = pl.reciprocal(denom, approx=True)        # EUP slot, off the VALU path
        r = r * (2.0 - denom * r)                    # one Newton step -> ~f32 exact
        P = P * r

        # ---- head-stacked P @ V, then ONE output-projection contraction --------
        PV = jnp.dot(P, V, preferred_element_type=jnp.float32)    # (2*Hq, E)
        PV_cat = jnp.concatenate([PV[:Hq], PV[Hq:]], axis=1)      # (Hq, 2E)
        # Row-masked Wo^T blocks (stacked along the contraction axis) pick exactly each
        # head's contribution, so this equals concat(heads) @ Wo^T without per-head loops.
        attn_out = jnp.dot(PV_cat, woT_ref[l],
                           preferred_element_type=jnp.float32)    # (Hq, E)
        attn_out = attn_out + vecs_ref[l, 1:2, :E]                # + bo

        # ---- residual + LayerNorm (biased variance, eps=1e-5 — torch semantics) -
        y = attn_out + queries
        mu = jnp.mean(y, axis=-1, keepdims=True)
        var = jnp.mean((y - mu) ** 2, axis=-1, keepdims=True)
        y = (y - mu) * lax.rsqrt(var + LN_EPS)
        y = y * vecs_ref[l, 2:3, :E] + vecs_ref[l, 3:4, :E]       # gamma, beta

        # head-averaged attention weights for this layer
        attn_refs[l][0] = (P[:Hq] + P[Hq:]) * (1.0 / NUM_HEADS)

        if l == L - 1:
            out_ref[0] = y
        else:
            kv = y       # next layer attends over this layer's output (seq: N -> Hq)


# ---------------------------------------------------------------------------
# Wrapper-side (batch-invariant) preparation: hoisted Q projection, scaling,
# head masks, transposes, fused/packed weight stacks.
# ---------------------------------------------------------------------------
def _prepare_layer_stacks(queries, layer_params):
    Hq, E = queries.shape
    hd = E // NUM_HEADS
    scale = 1.0 / np.sqrt(hd)
    col = jnp.arange(E)
    zeroE = jnp.zeros((E,), jnp.float32)

    qp_l, wkvT_l, woT_l, vecs_l = [], [], [], []
    for (wq, wk, wv, wo, bq, bk, bv, bo, g, b) in layer_params:
        Qs = (queries @ wq.T + bq[0]) * scale            # hoisted + pre-scaled, (Hq, E)
        woT = wo.T
        qp_heads, woT_heads = [], []
        for h in range(NUM_HEADS):
            m = ((col >= h * hd) & (col < (h + 1) * hd)).astype(jnp.float32)
            qp_heads.append(Qs * m[None, :])             # zero outside head columns
            woT_heads.append(woT * m[:, None])           # zero rows outside head slice
        qp_l.append(jnp.concatenate(qp_heads, axis=0))       # (NUM_HEADS*Hq, E)
        woT_l.append(jnp.concatenate(woT_heads, axis=0))     # (NUM_HEADS*E, E)
        wkvT_l.append(jnp.concatenate([wk.T, wv.T], axis=1))  # (E, 2E)
        vecs_l.append(jnp.stack([
            jnp.concatenate([bk[0], bv[0]]),             # row 0: [bk | bv]
            jnp.concatenate([bo[0], zeroE]),             # row 1: [bo | 0]
            jnp.concatenate([g[0], zeroE]),              # row 2: [gamma | 0]
            jnp.concatenate([b[0], zeroE]),              # row 3: [beta | 0]
        ]))                                              # (4, 2E)

    return (jnp.stack(qp_l), jnp.stack(wkvT_l), jnp.stack(woT_l), jnp.stack(vecs_l))


# ---------------------------------------------------------------------------
# One pallas_call for the whole model (all layers fused, grid over the batch).
# ---------------------------------------------------------------------------
def brain_attention_model(fc_matrix, learnable_axes, layer_params):
    """Equivalent of BrainAttentionModel.forward."""
    B, N, E = fc_matrix.shape
    Hq = learnable_axes.shape[0]
    L = len(layer_params)

    qp, wkvT, woT, vecs = _prepare_layer_stacks(learnable_axes, layer_params)
    x2d = fc_matrix.reshape(B * N, E)        # flatten once host-side (no in-kernel reshape)

    def whole(shape):
        nd = len(shape)
        return pl.BlockSpec(shape, lambda b, _nd=nd: (0,) * _nd)

    # Per-layer attention-weight outputs (key length changes after layer 0: N -> Hq).
    attn_shapes, attn_specs = [], []
    seq = N
    for _ in range(L):
        attn_shapes.append(jax.ShapeDtypeStruct((B, Hq, seq), jnp.float32))
        attn_specs.append(pl.BlockSpec((1, Hq, seq), lambda b: (b, 0, 0)))
        seq = Hq

    out_shapes = (jax.ShapeDtypeStruct((B, Hq, E), jnp.float32), *attn_shapes)
    out_specs = [pl.BlockSpec((1, Hq, E), lambda b: (b, 0, 0)), *attn_specs]

    results = pl.pallas_call(
        _fused_model_kernel,
        out_shape=out_shapes,
        grid_spec=pltpu.PrefetchScalarGridSpec(
            num_scalar_prefetch=0,
            grid=(B,),                                    # one batch element per step
            in_specs=[
                pl.BlockSpec((N, E), lambda b: (b, 0)),   # this batch element's x rows
                whole((Hq, E)),                           # queries (residual)
                whole((L, NUM_HEADS * Hq, E)),            # head-stacked scaled Q
                whole((L, E, 2 * E)),                     # [Wk^T | Wv^T]
                whole((L, NUM_HEADS * E, E)),             # head-masked Wo^T stack
                whole((L, 4, 2 * E)),                     # packed bk|bv, bo, gamma, beta
            ],
            out_specs=out_specs,
        ),
        compiler_params=pltpu.CompilerParams(
            dimension_semantics=("parallel",),
            vmem_limit_bytes=32 * 1024 * 1024,
        ),
    )(x2d, learnable_axes, qp, wkvT, woT, vecs)

    out = results[0]
    attn_all = list(results[1:])
    return out, attn_all


# ---------------------------------------------------------------------------
# Pure-JAX reference (mirrors torch.nn.MultiheadAttention + LayerNorm) for checking
# ---------------------------------------------------------------------------
def _reference_layer(x, queries, params):
    wq, wk, wv, wo, bq, bk, bv, bo, gamma, beta = params
    B, N, E = x.shape
    H = queries.shape[0]
    hd = E // NUM_HEADS
    q = jnp.broadcast_to(queries, (B, H, E))
    Q = q @ wq.T + bq[0]
    K = x @ wk.T + bk[0]
    V = x @ wv.T + bv[0]
    Q = Q.reshape(B, H, NUM_HEADS, hd).transpose(0, 2, 1, 3)
    K = K.reshape(B, N, NUM_HEADS, hd).transpose(0, 2, 1, 3)
    V = V.reshape(B, N, NUM_HEADS, hd).transpose(0, 2, 1, 3)
    S = jnp.einsum("bhqd,bhkd->bhqk", Q, K) / jnp.sqrt(jnp.float32(hd))
    P = jax.nn.softmax(S, axis=-1)
    O = jnp.einsum("bhqk,bhkd->bhqd", P, V)
    O = O.transpose(0, 2, 1, 3).reshape(B, H, E)
    attn_out = O @ wo.T + bo[0]
    y = attn_out + q
    mu = jnp.mean(y, axis=-1, keepdims=True)
    var = jnp.mean((y - mu) ** 2, axis=-1, keepdims=True)
    y = (y - mu) / jnp.sqrt(var + LN_EPS) * gamma[0] + beta[0]
    return y, jnp.mean(P, axis=1)


# ---------------------------------------------------------------------------
# Deterministic parameter init (synthetic; shapes from the module __init__)
# ---------------------------------------------------------------------------
def init_params(key, num_rois, num_hyperedges, num_layers):
    E = num_rois
    keys = jax.random.split(key, 2 + num_layers)
    learnable_axes = jax.random.normal(keys[0], (num_hyperedges, E), jnp.float32)

    layer_params = []
    for l in range(num_layers):
        ks = jax.random.split(keys[2 + l], 8)
        scale = 1.0 / np.sqrt(E)
        wq = jax.random.normal(ks[0], (E, E), jnp.float32) * scale
        wk = jax.random.normal(ks[1], (E, E), jnp.float32) * scale
        wv = jax.random.normal(ks[2], (E, E), jnp.float32) * scale
        wo = jax.random.normal(ks[3], (E, E), jnp.float32) * scale
        bq = jax.random.normal(ks[4], (1, E), jnp.float32) * 0.01
        bk = jax.random.normal(ks[5], (1, E), jnp.float32) * 0.01
        bv = jax.random.normal(ks[6], (1, E), jnp.float32) * 0.01
        bo = jax.random.normal(ks[7], (1, E), jnp.float32) * 0.01
        gamma = jnp.ones((1, E), jnp.float32)   # LayerNorm default init
        beta = jnp.zeros((1, E), jnp.float32)
        layer_params.append((wq, wk, wv, wo, bq, bk, bv, bo, gamma, beta))
    return learnable_axes, layer_params


if __name__ == "__main__":
    # Small, module-consistent shapes: fc_matrix is (B, num_rois, num_rois).
    # Two layers exercise the in-kernel layer fusion (kv length changes N -> Hq).
    B, num_rois, num_hyperedges, num_layers = 2, 32, 8, 2

    key = jax.random.PRNGKey(0)
    k_in, k_par = jax.random.split(key)
    fc_matrix = jax.random.normal(k_in, (B, num_rois, num_rois), jnp.float32)
    learnable_axes, layer_params = init_params(k_par, num_rois, num_hyperedges, num_layers)

    model = jax.jit(brain_attention_model)
    out, attn_all = model(fc_matrix, learnable_axes, layer_params)
    out = jax.block_until_ready(out)
    attn_all = [jax.block_until_ready(a) for a in attn_all]

    # correctness check against pure-JAX reference of the torch semantics
    ref_x = fc_matrix
    ref_ws = []
    for p in layer_params:
        ref_x, ref_w = _reference_layer(ref_x, learnable_axes, p)
        ref_ws.append(ref_w)
    np.testing.assert_allclose(np.asarray(out), np.asarray(ref_x), rtol=1e-4, atol=1e-4)
    for a, rw in zip(attn_all, ref_ws):
        np.testing.assert_allclose(np.asarray(a), np.asarray(rw), rtol=1e-4, atol=1e-4)

    assert out.shape == (B, num_hyperedges, num_rois)
    assert attn_all[0].shape == (B, num_hyperedges, num_rois)
    assert attn_all[1].shape == (B, num_hyperedges, num_hyperedges)
    print("KERNEL_OK")
</pallas_src>

<mosaic_0001>
module attributes {stable_mosaic.version = 11 : i64} {
  func.func @_fused_model_kernel(%arg0: i32, %arg1: memref<32x32xf32, #tpu.memory_space<vmem>>, %arg2: memref<8x32xf32, #tpu.memory_space<vmem>>, %arg3: memref<2x16x32xf32, #tpu.memory_space<vmem>>, %arg4: memref<2x32x64xf32, #tpu.memory_space<vmem>>, %arg5: memref<2x64x32xf32, #tpu.memory_space<vmem>>, %arg6: memref<2x4x64xf32, #tpu.memory_space<vmem>>, %arg7: memref<1x8x32xf32, #tpu.memory_space<vmem>>, %arg8: memref<1x8x32xf32, #tpu.memory_space<vmem>>, %arg9: memref<1x8x8xf32, #tpu.memory_space<vmem>>) attributes {dimension_semantics = [#tpu.dimension_semantics<parallel>], iteration_bounds = array<i64: 2>, scalar_prefetch = 0 : i64, scratch_operands = 0 : i64, tpu.core_type = #tpu.core_type<tc>, window_params = [{transform_indices = @transform_0, window_bounds = array<i64: 32, 32>}, {pipeline_mode = #tpu.pipeline_mode<synchronous>, transform_indices = @transform_1, window_bounds = array<i64: 8, 32>}, {pipeline_mode = #tpu.pipeline_mode<synchronous>, transform_indices = @transform_2, window_bounds = array<i64: 2, 16, 32>}, {pipeline_mode = #tpu.pipeline_mode<synchronous>, transform_indices = @transform_3, window_bounds = array<i64: 2, 32, 64>}, {pipeline_mode = #tpu.pipeline_mode<synchronous>, transform_indices = @transform_4, window_bounds = array<i64: 2, 64, 32>}, {pipeline_mode = #tpu.pipeline_mode<synchronous>, transform_indices = @transform_5, window_bounds = array<i64: 2, 4, 64>}, {transform_indices = @transform_6, window_bounds = array<i64: 1, 8, 32>}, {transform_indices = @transform_7, window_bounds = array<i64: 1, 8, 32>}, {transform_indices = @transform_8, window_bounds = array<i64: 1, 8, 8>}]} {
    %c0 = arith.constant 0 : index
    %c0_0 = arith.constant 0 : index
    %0 = vector.load %arg2[%c0, %c0_0] : memref<8x32xf32, #tpu.memory_space<vmem>>, vector<8x32xf32>
    %c0_1 = arith.constant 0 : index
    %c0_2 = arith.constant 0 : index
    %1 = vector.load %arg1[%c0_1, %c0_2] : memref<32x32xf32, #tpu.memory_space<vmem>>, vector<32x32xf32>
    %c0_3 = arith.constant 0 : index
    %c0_4 = arith.constant 0 : index
    %c0_5 = arith.constant 0 : index
    %2 = vector.load %arg4[%c0_3, %c0_4, %c0_5] : memref<2x32x64xf32, #tpu.memory_space<vmem>>, vector<1x32x64xf32>
    %3 = vector.shape_cast %2 : vector<1x32x64xf32> to vector<32x64xf32>
    %cst = arith.constant dense<0.000000e+00> : vector<32x64xf32>
    %4 = tpu.matmul %1, %3, %cst {dimension_numbers = #tpu.dot_dimension_numbers<[1], [0], [0], [1], [0, 0, 1, 1], [], []>} : vector<32x32xf32>, vector<32x64xf32>, vector<32x64xf32> -> vector<32x64xf32>
    %c0_6 = arith.constant 0 : index
    %c0_7 = arith.constant 0 : index
    %c0_8 = arith.constant 0 : index
    %5 = vector.load %arg6[%c0_6, %c0_7, %c0_8] : memref<2x4x64xf32, #tpu.memory_space<vmem>>, vector<1x1x64xf32>
    %6 = vector.shape_cast %5 : vector<1x1x64xf32> to vector<1x64xf32>
    %7 = vector.broadcast %6 : vector<1x64xf32> to vector<32x64xf32>
    %8 = arith.addf %4, %7 : vector<32x64xf32>
    %9 = vector.extract_strided_slice %8 {offsets = [0, 0], sizes = [32, 32], strides = [1, 1]} : vector<32x64xf32> to vector<32x32xf32>
    %10 = vector.extract_strided_slice %8 {offsets = [0, 32], sizes = [32, 32], strides = [1, 1]} : vector<32x64xf32> to vector<32x32xf32>
    %c0_9 = arith.constant 0 : index
    %c0_10 = arith.constant 0 : index
    %c0_11 = arith.constant 0 : index
    %11 = vector.load %arg3[%c0_9, %c0_10, %c0_11] : memref<2x16x32xf32, #tpu.memory_space<vmem>>, vector<1x16x32xf32>
    %12 = vector.shape_cast %11 : vector<1x16x32xf32> to vector<16x32xf32>
    %cst_12 = arith.constant dense<0.000000e+00> : vector<16x32xf32>
    %13 = tpu.matmul %12, %9, %cst_12 {dimension_numbers = #tpu.dot_dimension_numbers<[1], [1], [0], [0], [0, 0, 1, 0], [], []>} : vector<16x32xf32>, vector<32x32xf32>, vector<16x32xf32> -> vector<16x32xf32>
    %cst_13 = arith.constant dense<0xFF800000> : vector<16xf32>
    %14 = vector.multi_reduction <maximumf>, %13, %cst_13 [1] : vector<16x32xf32> to vector<16xf32>
    %15 = vector.shape_cast %14 : vector<16xf32> to vector<16x1xf32>
    %16 = vector.broadcast %15 : vector<16x1xf32> to vector<16x32xf32>
    %17 = arith.subf %13, %16 : vector<16x32xf32>
    %18 = math.exp %17 : vector<16x32xf32>
    %cst_14 = arith.constant dense<0.000000e+00> : vector<16xf32>
    %19 = vector.multi_reduction <add>, %18, %cst_14 [1] : vector<16x32xf32> to vector<16xf32>
    %20 = vector.shape_cast %19 : vector<16xf32> to vector<16x1xf32>
    %21 = tpu.reciprocal %20 {approx = true} : vector<16x1xf32> -> vector<16x1xf32>
    %22 = arith.mulf %20, %21 : vector<16x1xf32>
    %cst_15 = arith.constant 2.000000e+00 : f32
    %23 = vector.broadcast %cst_15 : f32 to vector<16x1xf32>
    %24 = arith.subf %23, %22 : vector<16x1xf32>
    %25 = arith.mulf %21, %24 : vector<16x1xf32>
    %26 = vector.broadcast %25 : vector<16x1xf32> to vector<16x32xf32>
    %27 = arith.mulf %18, %26 : vector<16x32xf32>
    %cst_16 = arith.constant dense<0.000000e+00> : vector<16x32xf32>
    %28 = tpu.matmul %27, %10, %cst_16 {dimension_numbers = #tpu.dot_dimension_numbers<[1], [0], [0], [1], [0, 0, 1, 1], [], []>} : vector<16x32xf32>, vector<32x32xf32>, vector<16x32xf32> -> vector<16x32xf32>
    %29 = vector.extract_strided_slice %28 {offsets = [0, 0], sizes = [8, 32], strides = [1, 1]} : vector<16x32xf32> to vector<8x32xf32>
    %30 = vector.extract_strided_slice %28 {offsets = [8, 0], sizes = [8, 32], strides = [1, 1]} : vector<16x32xf32> to vector<8x32xf32>
    %31 = tpu.concatenate %29, %30 in 1 : vector<8x32xf32>, vector<8x32xf32> -> vector<8x64xf32>
    %c0_17 = arith.constant 0 : index
    %c0_18 = arith.constant 0 : index
    %c0_19 = arith.constant 0 : index
    %32 = vector.load %arg5[%c0_17, %c0_18, %c0_19] : memref<2x64x32xf32, #tpu.memory_space<vmem>>, vector<1x64x32xf32>
    %33 = vector.shape_cast %32 : vector<1x64x32xf32> to vector<64x32xf32>
    %cst_20 = arith.constant dense<0.000000e+00> : vector<8x32xf32>
    %34 = tpu.matmul %31, %33, %cst_20 {dimension_numbers = #tpu.dot_dimension_numbers<[1], [0], [0], [1], [0, 0, 1, 1], [], []>} : vector<8x64xf32>, vector<64x32xf32>, vector<8x32xf32> -> vector<8x32xf32>
    %c0_21 = arith.constant 0 : index
    %c1 = arith.constant 1 : index
    %c0_22 = arith.constant 0 : index
    %35 = vector.load %arg6[%c0_21, %c1, %c0_22] : memref<2x4x64xf32, #tpu.memory_space<vmem>>, vector<1x1x32xf32>
    %36 = vector.shape_cast %35 : vector<1x1x32xf32> to vector<1x32xf32>
    %37 = vector.broadcast %36 : vector<1x32xf32> to vector<8x32xf32>
    %38 = arith.addf %34, %37 : vector<8x32xf32>
    %39 = arith.addf %38, %0 : vector<8x32xf32>
    %cst_23 = arith.constant dense<0.000000e+00> : vector<8xf32>
    %40 = vector.multi_reduction <add>, %39, %cst_23 [1] : vector<8x32xf32> to vector<8xf32>
    %41 = vector.shape_cast %40 : vector<8xf32> to vector<8x1xf32>
    %cst_24 = arith.constant 3.200000e+01 : f32
    %42 = vector.broadcast %cst_24 : f32 to vector<8x1xf32>
    %43 = arith.divf %41, %42 : vector<8x1xf32>
    %44 = vector.broadcast %43 : vector<8x1xf32> to vector<8x32xf32>
    %45 = arith.subf %39, %44 : vector<8x32xf32>
    %46 = arith.mulf %45, %45 : vector<8x32xf32>
    %cst_25 = arith.constant dense<0.000000e+00> : vector<8xf32>
    %47 = vector.multi_reduction <add>, %46, %cst_25 [1] : vector<8x32xf32> to vector<8xf32>
    %48 = vector.shape_cast %47 : vector<8xf32> to vector<8x1xf32>
    %cst_26 = arith.constant 3.200000e+01 : f32
    %49 = vector.broadcast %cst_26 : f32 to vector<8x1xf32>
    %50 = arith.divf %48, %49 : vector<8x1xf32>
    %51 = vector.broadcast %43 : vector<8x1xf32> to vector<8x32xf32>
    %52 = arith.subf %39, %51 : vector<8x32xf32>
    %cst_27 = arith.constant 9.99999974E-6 : f32
    %53 = vector.broadcast %cst_27 : f32 to vector<8x1xf32>
    %54 = arith.addf %50, %53 : vector<8x1xf32>
    %55 = math.rsqrt %54 : vector<8x1xf32>
    %56 = vector.broadcast %55 : vector<8x1xf32> to vector<8x32xf32>
    %57 = arith.mulf %52, %56 : vector<8x32xf32>
    %c0_28 = arith.constant 0 : index
    %c2 = arith.constant 2 : index
    %c0_29 = arith.constant 0 : index
    %58 = vector.load %arg6[%c0_28, %c2, %c0_29] : memref<2x4x64xf32, #tpu.memory_space<vmem>>, vector<1x1x32xf32>
    %59 = vector.shape_cast %58 : vector<1x1x32xf32> to vector<1x32xf32>
    %60 = vector.broadcast %59 : vector<1x32xf32> to vector<8x32xf32>
    %61 = arith.mulf %57, %60 : vector<8x32xf32>
    %c0_30 = arith.constant 0 : index
    %c3 = arith.constant 3 : index
    %c0_31 = arith.constant 0 : index
    %62 = vector.load %arg6[%c0_30, %c3, %c0_31] : memref<2x4x64xf32, #tpu.memory_space<vmem>>, vector<1x1x32xf32>
    %63 = vector.shape_cast %62 : vector<1x1x32xf32> to vector<1x32xf32>
    %64 = vector.broadcast %63 : vector<1x32xf32> to vector<8x32xf32>
    %65 = arith.addf %61, %64 : vector<8x32xf32>
    %66 = vector.extract_strided_slice %27 {offsets = [0, 0], sizes = [8, 32], strides = [1, 1]} : vector<16x32xf32> to vector<8x32xf32>
    %67 = vector.extract_strided_slice %27 {offsets = [8, 0], sizes = [8, 32], strides = [1, 1]} : vector<16x32xf32> to vector<8x32xf32>
    %68 = arith.addf %66, %67 : vector<8x32xf32>
    %cst_32 = arith.constant 5.000000e-01 : f32
    %69 = vector.broadcast %cst_32 : f32 to vector<8x32xf32>
    %70 = arith.mulf %68, %69 : vector<8x32xf32>
    %c0_33 = arith.constant 0 : index
    %c0_34 = arith.constant 0 : index
    %c0_35 = arith.constant 0 : index
    %71 = vector.load %arg8[%c0_33, %c0_34, %c0_35] : memref<1x8x32xf32, #tpu.memory_space<vmem>>, vector<1x8x32xf32>
    %72 = vector.shape_cast %71 : vector<1x8x32xf32> to vector<8x32xf32>
    %73 = vector.shape_cast %70 : vector<8x32xf32> to vector<1x8x32xf32>
    tpu.vector_store %arg8[%c0_33, %c0_34, %c0_35], %73 {strides = array<i32>} : memref<1x8x32xf32, #tpu.memory_space<vmem>>, vector<1x8x32xf32>,
    %c1_36 = arith.constant 1 : index
    %c0_37 = arith.constant 0 : index
    %c0_38 = arith.constant 0 : index
    %74 = vector.load %arg4[%c1_36, %c0_37, %c0_38] : memref<2x32x64xf32, #tpu.memory_space<vmem>>, vector<1x32x64xf32>
    %75 = vector.shape_cast %74 : vector<1x32x64xf32> to vector<32x64xf32>
    %cst_39 = arith.constant dense<0.000000e+00> : vector<8x64xf32>
    %76 = tpu.matmul %65, %75, %cst_39 {dimension_numbers = #tpu.dot_dimension_numbers<[1], [0], [0], [1], [0, 0, 1, 1], [], []>} : vector<8x32xf32>, vector<32x64xf32>, vector<8x64xf32> -> vector<8x64xf32>
    %c1_40 = arith.constant 1 : index
    %c0_41 = arith.constant 0 : index
    %c0_42 = arith.constant 0 : index
    %77 = vector.load %arg6[%c1_40, %c0_41, %c0_42] : memref<2x4x64xf32, #tpu.memory_space<vmem>>, vector<1x1x64xf32>
    %78 = vector.shape_cast %77 : vector<1x1x64xf32> to vector<1x64xf32>
    %79 = vector.broadcast %78 : vector<1x64xf32> to vector<8x64xf32>
    %80 = arith.addf %76, %79 : vector<8x64xf32>
    %81 = vector.extract_strided_slice %80 {offsets = [0, 0], sizes = [8, 32], strides = [1, 1]} : vector<8x64xf32> to vector<8x32xf32>
    %82 = vector.extract_strided_slice %80 {offsets = [0, 32], sizes = [8, 32], strides = [1, 1]} : vector<8x64xf32> to vector<8x32xf32>
    %c1_43 = arith.constant 1 : index
    %c0_44 = arith.constant 0 : index
    %c0_45 = arith.constant 0 : index
    %83 = vector.load %arg3[%c1_43, %c0_44, %c0_45] : memref<2x16x32xf32, #tpu.memory_space<vmem>>, vector<1x16x32xf32>
    %84 = vector.shape_cast %83 : vector<1x16x32xf32> to vector<16x32xf32>
    %cst_46 = arith.constant dense<0.000000e+00> : vector<16x8xf32>
    %85 = tpu.matmul %84, %81, %cst_46 {dimension_numbers = #tpu.dot_dimension_numbers<[1], [1], [0], [0], [0, 0, 1, 0], [], []>} : vector<16x32xf32>, vector<8x32xf32>, vector<16x8xf32> -> vector<16x8xf32>
    %cst_47 = arith.constant dense<0xFF800000> : vector<16xf32>
    %86 = vector.multi_reduction <maximumf>, %85, %cst_47 [1] : vector<16x8xf32> to vector<16xf32>
    %87 = vector.shape_cast %86 : vector<16xf32> to vector<16x1xf32>
    %88 = vector.broadcast %87 : vector<16x1xf32> to vector<16x8xf32>
    %89 = arith.subf %85, %88 : vector<16x8xf32>
    %90 = math.exp %89 : vector<16x8xf32>
    %cst_48 = arith.constant dense<0.000000e+00> : vector<16xf32>
    %91 = vector.multi_reduction <add>, %90, %cst_48 [1] : vector<16x8xf32> to vector<16xf32>
    %92 = vector.shape_cast %91 : vector<16xf32> to vector<16x1xf32>
    %93 = tpu.reciprocal %92 {approx = true} : vector<16x1xf32> -> vector<16x1xf32>
    %94 = arith.mulf %92, %93 : vector<16x1xf32>
    %cst_49 = arith.constant 2.000000e+00 : f32
    %95 = vector.broadcast %cst_49 : f32 to vector<16x1xf32>
    %96 = arith.subf %95, %94 : vector<16x1xf32>
    %97 = arith.mulf %93, %96 : vector<16x1xf32>
    %98 = vector.broadcast %97 : vector<16x1xf32> to vector<16x8xf32>
    %99 = arith.mulf %90, %98 : vector<16x8xf32>
    %cst_50 = arith.constant dense<0.000000e+00> : vector<16x32xf32>
    %100 = tpu.matmul %99, %82, %cst_50 {dimension_numbers = #tpu.dot_dimension_numbers<[1], [0], [0], [1], [0, 0, 1, 1], [], []>} : vector<16x8xf32>, vector<8x32xf32>, vector<16x32xf32> -> vector<16x32xf32>
    %101 = vector.extract_strided_slice %100 {offsets = [0, 0], sizes = [8, 32], strides = [1, 1]} : vector<16x32xf32> to vector<8x32xf32>
    %102 = vector.extract_strided_slice %100 {offsets = [8, 0], sizes = [8, 32], strides = [1, 1]} : vector<16x32xf32> to vector<8x32xf32>
    %103 = tpu.concatenate %101, %102 in 1 : vector<8x32xf32>, vector<8x32xf32> -> vector<8x64xf32>
    %c1_51 = arith.constant 1 : index
    %c0_52 = arith.constant 0 : index
    %c0_53 = arith.constant 0 : index
    %104 = vector.load %arg5[%c1_51, %c0_52, %c0_53] : memref<2x64x32xf32, #tpu.memory_space<vmem>>, vector<1x64x32xf32>
    %105 = vector.shape_cast %104 : vector<1x64x32xf32> to vector<64x32xf32>
    %cst_54 = arith.constant dense<0.000000e+00> : vector<8x32xf32>
    %106 = tpu.matmul %103, %105, %cst_54 {dimension_numbers = #tpu.dot_dimension_numbers<[1], [0], [0], [1], [0, 0, 1, 1], [], []>} : vector<8x64xf32>, vector<64x32xf32>, vector<8x32xf32> -> vector<8x32xf32>
    %c1_55 = arith.constant 1 : index
    %c1_56 = arith.constant 1 : index
    %c0_57 = arith.constant 0 : index
    %107 = vector.load %arg6[%c1_55, %c1_56, %c0_57] : memref<2x4x64xf32, #tpu.memory_space<vmem>>, vector<1x1x32xf32>
    %108 = vector.shape_cast %107 : vector<1x1x32xf32> to vector<1x32xf32>
    %109 = vector.broadcast %108 : vector<1x32xf32> to vector<8x32xf32>
    %110 = arith.addf %106, %109 : vector<8x32xf32>
    %111 = arith.addf %110, %0 : vector<8x32xf32>
    %cst_58 = arith.constant dense<0.000000e+00> : vector<8xf32>
    %112 = vector.multi_reduction <add>, %111, %cst_58 [1] : vector<8x32xf32> to vector<8xf32>
    %113 = vector.shape_cast %112 : vector<8xf32> to vector<8x1xf32>
    %cst_59 = arith.constant 3.200000e+01 : f32
    %114 = vector.broadcast %cst_59 : f32 to vector<8x1xf32>
    %115 = arith.divf %113, %114 : vector<8x1xf32>
    %116 = vector.broadcast %115 : vector<8x1xf32> to vector<8x32xf32>
    %117 = arith.subf %111, %116 : vector<8x32xf32>
    %118 = arith.mulf %117, %117 : vector<8x32xf32>
    %cst_60 = arith.constant dense<0.000000e+00> : vector<8xf32>
    %119 = vector.multi_reduction <add>, %118, %cst_60 [1] : vector<8x32xf32> to vector<8xf32>
    %120 = vector.shape_cast %119 : vector<8xf32> to vector<8x1xf32>
    %cst_61 = arith.constant 3.200000e+01 : f32
    %121 = vector.broadcast %cst_61 : f32 to vector<8x1xf32>
    %122 = arith.divf %120, %121 : vector<8x1xf32>
    %123 = vector.broadcast %115 : vector<8x1xf32> to vector<8x32xf32>
    %124 = arith.subf %111, %123 : vector<8x32xf32>
    %cst_62 = arith.constant 9.99999974E-6 : f32
    %125 = vector.broadcast %cst_62 : f32 to vector<8x1xf32>
    %126 = arith.addf %122, %125 : vector<8x1xf32>
    %127 = math.rsqrt %126 : vector<8x1xf32>
    %128 = vector.broadcast %127 : vector<8x1xf32> to vector<8x32xf32>
    %129 = arith.mulf %124, %128 : vector<8x32xf32>
    %c1_63 = arith.constant 1 : index
    %c2_64 = arith.constant 2 : index
    %c0_65 = arith.constant 0 : index
    %130 = vector.load %arg6[%c1_63, %c2_64, %c0_65] : memref<2x4x64xf32, #tpu.memory_space<vmem>>, vector<1x1x32xf32>
    %131 = vector.shape_cast %130 : vector<1x1x32xf32> to vector<1x32xf32>
    %132 = vector.broadcast %131 : vector<1x32xf32> to vector<8x32xf32>
    %133 = arith.mulf %129, %132 : vector<8x32xf32>
    %c1_66 = arith.constant 1 : index
    %c3_67 = arith.constant 3 : index
    %c0_68 = arith.constant 0 : index
    %134 = vector.load %arg6[%c1_66, %c3_67, %c0_68] : memref<2x4x64xf32, #tpu.memory_space<vmem>>, vector<1x1x32xf32>
    %135 = vector.shape_cast %134 : vector<1x1x32xf32> to vector<1x32xf32>
    %136 = vector.broadcast %135 : vector<1x32xf32> to vector<8x32xf32>
    %137 = arith.addf %133, %136 : vector<8x32xf32>
    %138 = vector.extract_strided_slice %99 {offsets = [0, 0], sizes = [8, 8], strides = [1, 1]} : vector<16x8xf32> to vector<8x8xf32>
    %139 = vector.extract_strided_slice %99 {offsets = [8, 0], sizes = [8, 8], strides = [1, 1]} : vector<16x8xf32> to vector<8x8xf32>
    %140 = arith.addf %138, %139 : vector<8x8xf32>
    %cst_69 = arith.constant 5.000000e-01 : f32
    %141 = vector.broadcast %cst_69 : f32 to vector<8x8xf32>
    %142 = arith.mulf %140, %141 : vector<8x8xf32>
    %c0_70 = arith.constant 0 : index
    %c0_71 = arith.constant 0 : index
    %c0_72 = arith.constant 0 : index
    %143 = vector.load %arg9[%c0_70, %c0_71, %c0_72] : memref<1x8x8xf32, #tpu.memory_space<vmem>>, vector<1x8x8xf32>
    %144 = vector.shape_cast %143 : vector<1x8x8xf32> to vector<8x8xf32>
    %145 = vector.shape_cast %142 : vector<8x8xf32> to vector<1x8x8xf32>
    tpu.vector_store %arg9[%c0_70, %c0_71, %c0_72], %145 {strides = array<i32>} : memref<1x8x8xf32, #tpu.memory_space<vmem>>, vector<1x8x8xf32>,
    %c0_73 = arith.constant 0 : index
    %c0_74 = arith.constant 0 : index
    %c0_75 = arith.constant 0 : index
    %146 = vector.load %arg7[%c0_73, %c0_74, %c0_75] : memref<1x8x32xf32, #tpu.memory_space<vmem>>, vector<1x8x32xf32>
    %147 = vector.shape_cast %146 : vector<1x8x32xf32> to vector<8x32xf32>
    %148 = vector.shape_cast %137 : vector<8x32xf32> to vector<1x8x32xf32>
    tpu.vector_store %arg7[%c0_73, %c0_74, %c0_75], %148 {strides = array<i32>} : memref<1x8x32xf32, #tpu.memory_space<vmem>>, vector<1x8x32xf32>,
    return
  }
  func.func @transform_0(%arg0: i32) -> (i32, i32) {
    %c0_i32 = arith.constant 0 : i32
    %c0_i32_0 = arith.constant 0 : i32
    return %arg0, %c0_i32 : i32, i32
  }
  func.func @transform_1(%arg0: i32) -> (i32, i32) {
    %c0_i32 = arith.constant 0 : i32
    %c0_i32_0 = arith.constant 0 : i32
    %c0_i32_1 = arith.constant 0 : i32
    return %c0_i32, %c0_i32_0 : i32, i32
  }
  func.func @transform_2(%arg0: i32) -> (i32, i32, i32) {
    %c0_i32 = arith.constant 0 : i32
    %c0_i32_0 = arith.constant 0 : i32
    %c0_i32_1 = arith.constant 0 : i32
    %c0_i32_2 = arith.constant 0 : i32
    return %c0_i32, %c0_i32_0, %c0_i32_1 : i32, i32, i32
  }
  func.func @transform_3(%arg0: i32) -> (i32, i32, i32) {
    %c0_i32 = arith.constant 0 : i32
    %c0_i32_0 = arith.constant 0 : i32
    %c0_i32_1 = arith.constant 0 : i32
    %c0_i32_2 = arith.constant 0 : i32
    return %c0_i32, %c0_i32_0, %c0_i32_1 : i32, i32, i32
  }
  func.func @transform_4(%arg0: i32) -> (i32, i32, i32) {
    %c0_i32 = arith.constant 0 : i32
    %c0_i32_0 = arith.constant 0 : i32
    %c0_i32_1 = arith.constant 0 : i32
    %c0_i32_2 = arith.constant 0 : i32
    return %c0_i32, %c0_i32_0, %c0_i32_1 : i32, i32, i32
  }
  func.func @transform_5(%arg0: i32) -> (i32, i32, i32) {
    %c0_i32 = arith.constant 0 : i32
    %c0_i32_0 = arith.constant 0 : i32
    %c0_i32_1 = arith.constant 0 : i32
    %c0_i32_2 = arith.constant 0 : i32
    return %c0_i32, %c0_i32_0, %c0_i32_1 : i32, i32, i32
  }
  func.func @transform_6(%arg0: i32) -> (i32, i32, i32) {
    %c0_i32 = arith.constant 0 : i32
    %c0_i32_0 = arith.constant 0 : i32
    %c0_i32_1 = arith.constant 0 : i32
    return %arg0, %c0_i32, %c0_i32_0 : i32, i32, i32
  }
  func.func @transform_7(%arg0: i32) -> (i32, i32, i32) {
    %c0_i32 = arith.constant 0 : i32
    %c0_i32_0 = arith.constant 0 : i32
    %c0_i32_1 = arith.constant 0 : i32
    return %arg0, %c0_i32, %c0_i32_0 : i32, i32, i32
  }
  func.func @transform_8(%arg0: i32) -> (i32, i32, i32) {
    %c0_i32 = arith.constant 0 : i32
    %c0_i32_0 = arith.constant 0 : i32
    %c0_i32_1 = arith.constant 0 : i32
    return %arg0, %c0_i32, %c0_i32_0 : i32, i32, i32
  }
}

</mosaic_0001>

<llo_original>
// kernel: brain_attention_model.1
$region0: #{brain_attention_model.1}
  #allocation0 [shape = 'u32[]', space=smem, size = 0x4, offset = 0x4, fixed_abs, tag = 'smem constant byte address 0x4 - core index']
  #allocation1 [shape = 'u32[144,128]{1,0:T(1,128)}', space=vmem, size = 0x12000, scoped, tag = 'internal scratch']
  %s0 = inlined_call_operand.vmem [shape: f32[64,32], index: 0, kind: input, shape index: {}]
  %s1 = inlined_call_operand.vmem [shape: f32[8,32], index: 1, kind: input, shape index: {}]
  %s2 = inlined_call_operand.vmem [shape: f32[2,16,32], index: 2, kind: input, shape index: {}]
  %s3 = inlined_call_operand.vmem [shape: f32[2,32,64], index: 3, kind: input, shape index: {}]
  %s4 = inlined_call_operand.vmem [shape: f32[2,64,32], index: 4, kind: input, shape index: {}]
  %s5 = inlined_call_operand.vmem [shape: f32[2,4,64], index: 5, kind: input, shape index: {}]
  %s6 = inlined_call_operand.hbm [shape: f32[2,8,32], index: 6, kind: output, shape index: {0}]
  %s7 = inlined_call_operand.hbm [shape: f32[2,8,32], index: 7, kind: output, shape index: {1}]
  %s8 = inlined_call_operand.hbm [shape: f32[2,8,8], index: 8, kind: output, shape index: {2}]
  %9 = xla_tuple %s6, %s7, %s8
  %s10 = sld [smem:[#allocation0]]
  $region73: #{brain_attention_model.1} parent=0
    _
  %s12 = ssub.s32 1, %s10
  %s13 = scalar_select 0, %s12, %s10
  $region1: #{brain_attention_model.1} parent=0
    #allocation2 [shape = 'u8[8192]{0}', space=vmem, size = 0x2000, scoped, tag = 'output window, operand 0']
    #allocation3 [shape = 's32[2]{0}', space=sflag, size = 0x8, scoped, tag = 'scoped memory for brain_attention_model.1']
    #allocation4 [shape = 'u8[8192]{0}', space=vmem, size = 0x2000, scoped, tag = 'output window, operand 1']
    #allocation5 [shape = 's32[2]{0}', space=sflag, size = 0x8, scoped, tag = 'scoped memory for brain_attention_model.1']
    #allocation6 [shape = 'u8[8192]{0}', space=vmem, size = 0x2000, scoped, tag = 'output window, operand 2']
    %14 = vsyncpa [#allocation3], 0
    %s15 = scalar_lea.sflag [#allocation3], 1
    %16 = vsyncpa %s15, 0
    %17 = vsyncpa [#allocation5], 0
    %s18 = scalar_lea.sflag [#allocation5], 1
    %19 = vsyncpa %s18, 0
    loop: start=0, step=1, limit=4
    $region2: #{brain_attention_model.1} parent=1 // loop_pre_header
      _
    $region3: #{brain_attention_model.1} parent=1 // loop_header
      %s21 = sphi 0, %s25
      %p22 = scmp.ge.s32.totalorder %s21, 4
      %s31 = sphi 0, %s33
      %s34 = sphi 0, %s31
      %s35 = sphi 0, %s34
      %s51 = sphi 0, %s35
      %s55 = sphi 0, %s55
      %s57 = sphi 0, %s55
      %s58 = sphi 0, %s57
      %s72 = sphi 0, %s58
      %s76 = sphi 0, %s76
      %s78 = sphi 0, %s76
      %s79 = sphi 0, %s78
      %s93 = sphi 0, %s79
      %s97 = sphi 0, %s97
      %s99 = sphi 0, %s97
      %s100 = sphi 0, %s99
      %s114 = sphi 0, %s100
      %s118 = sphi 0, %s118
      %s120 = sphi 0, %s118
      %s121 = sphi 0, %s120
      %s135 = sphi 0, %s121
      %s139 = sphi 0, %s139
      %s141 = sphi 0, %s139
      %s142 = sphi 0, %s141
      %s156 = sphi 0, %s142
      %s162 = sphi 0, %s164
      %s165 = sphi 0, %s162
      %s166 = sphi 0, %s165
      %s182 = sphi 0, %s166
      %s188 = sphi 0, %s190
      %s191 = sphi 0, %s188
      %s192 = sphi 0, %s191
      %s208 = sphi 0, %s192
      %s214 = sphi 0, %s216
      %s217 = sphi 0, %s214
      %s218 = sphi 0, %s217
      %s234 = sphi 0, %s218
    $region4: #{brain_attention_model.1} parent=1 // loop_header_branch
      %24 = sbr.rel (%p22) target = $region8
    $region5: #{brain_attention_model.1} parent=1 // loop_body
      %s26 = ssub.s32 %s21, 1
      %s27 = ssub.s32 %s21, 2
      %s28 = sadd.s32 %s21, 1
      %s29 = ssub.s32 %s21, %s28
      %p30 = scmp.eq.s32.totalorder %s29, 0
      %s32 = sadd.s32 %s31, 1
      %s33 = scalar_select %p30, %s31, %s32
      %p36 = pneg %p30
      %p37 = scmp.eq.s32.totalorder %s21, 1
      %p38 = por %p36, %p37
      %p39 = scmp.ne.s32.totalorder %s31, %s34
      %p40 = scmp.eq.s32.totalorder %s21, 0
      %p41 = por %p39, %p40
      %p42 = scmp.ne.s32.totalorder %s31, %s34
      %p43 = scmp.eq.s32.totalorder %s26, 1
      %p44 = por %p42, %p43
      %p45 = scmp.ne.s32.totalorder %s34, %s35
      %p46 = scmp.eq.s32.totalorder %s26, 0
      %p47 = por %p45, %p46
      %p48 = scmp.ne.s32.totalorder %s34, %s35
      %p49 = scmp.eq.s32.totalorder %s27, 1
      %p50 = por %p48, %p49
      %p52 = scmp.ne.s32.totalorder %s35, %s51
      %p53 = scmp.eq.s32.totalorder %s27, 0
      %p54 = por %p52, %p53
      %s56 = sadd.s32 %s55, 1
      %p59 = scmp.eq.s32.totalorder %s21, 1
      %p60 = scmp.ne.s32.totalorder %s55, %s57
      %p61 = scmp.eq.s32.totalorder %s21, 0
      %p62 = por %p60, %p61
      %p63 = scmp.ne.s32.totalorder %s55, %s57
      %p64 = scmp.eq.s32.totalorder %s26, 1
      %p65 = por %p63, %p64
      %p66 = scmp.ne.s32.totalorder %s57, %s58
      %p67 = scmp.eq.s32.totalorder %s26, 0
      %p68 = por %p66, %p67
      %p69 = scmp.ne.s32.totalorder %s57, %s58
      %p70 = scmp.eq.s32.totalorder %s27, 1
      %p71 = por %p69, %p70
      %p73 = scmp.ne.s32.totalorder %s58, %s72
      %p74 = scmp.eq.s32.totalorder %s27, 0
      %p75 = por %p73, %p74
      %s77 = sadd.s32 %s76, 1
      %p80 = scmp.eq.s32.totalorder %s21, 1
      %p81 = scmp.ne.s32.totalorder %s76, %s78
      %p82 = scmp.eq.s32.totalorder %s21, 0
      %p83 = por %p81, %p82
      %p84 = scmp.ne.s32.totalorder %s76, %s78
      %p85 = scmp.eq.s32.totalorder %s26, 1
      %p86 = por %p84, %p85
      %p87 = scmp.ne.s32.totalorder %s78, %s79
      %p88 = scmp.eq.s32.totalorder %s26, 0
      %p89 = por %p87, %p88
      %p90 = scmp.ne.s32.totalorder %s78, %s79
      %p91 = scmp.eq.s32.totalorder %s27, 1
      %p92 = por %p90, %p91
      %p94 = scmp.ne.s32.totalorder %s79, %s93
      %p95 = scmp.eq.s32.totalorder %s27, 0
      %p96 = por %p94, %p95
      %s98 = sadd.s32 %s97, 1
      %p101 = scmp.eq.s32.totalorder %s21, 1
      %p102 = scmp.ne.s32.totalorder %s97, %s99
      %p103 = scmp.eq.s32.totalorder %s21, 0
      %p104 = por %p102, %p103
      %p105 = scmp.ne.s32.totalorder %s97, %s99
      %p106 = scmp.eq.s32.totalorder %s26, 1
      %p107 = por %p105, %p106
      %p108 = scmp.ne.s32.totalorder %s99, %s100
      %p109 = scmp.eq.s32.totalorder %s26, 0
      %p110 = por %p108, %p109
      %p111 = scmp.ne.s32.totalorder %s99, %s100
      %p112 = scmp.eq.s32.totalorder %s27, 1
      %p113 = por %p111, %p112
      %p115 = scmp.ne.s32.totalorder %s100, %s114
      %p116 = scmp.eq.s32.totalorder %s27, 0
      %p117 = por %p115, %p116
      %s119 = sadd.s32 %s118, 1
      %p122 = scmp.eq.s32.totalorder %s21, 1
      %p123 = scmp.ne.s32.totalorder %s118, %s120
      %p124 = scmp.eq.s32.totalorder %s21, 0
      %p125 = por %p123, %p124
      %p126 = scmp.ne.s32.totalorder %s118, %s120
      %p127 = scmp.eq.s32.totalorder %s26, 1
      %p128 = por %p126, %p127
      %p129 = scmp.ne.s32.totalorder %s120, %s121
      %p130 = scmp.eq.s32.totalorder %s26, 0
      %p131 = por %p129, %p130
      %p132 = scmp.ne.s32.totalorder %s120, %s121
      %p133 = scmp.eq.s32.totalorder %s27, 1
      %p134 = por %p132, %p133
      %p136 = scmp.ne.s32.totalorder %s121, %s135
      %p137 = scmp.eq.s32.totalorder %s27, 0
      %p138 = por %p136, %p137
      %s140 = sadd.s32 %s139, 1
      %p143 = scmp.eq.s32.totalorder %s21, 1
      %p144 = scmp.ne.s32.totalorder %s139, %s141
      %p145 = scmp.eq.s32.totalorder %s21, 0
      %p146 = por %p144, %p145
      %p147 = scmp.ne.s32.totalorder %s139, %s141
      %p148 = scmp.eq.s32.totalorder %s26, 1
      %p149 = por %p147, %p148
      %p150 = scmp.ne.s32.totalorder %s141, %s142
      %p151 = scmp.eq.s32.totalorder %s26, 0
      %p152 = por %p150, %p151
      %p153 = scmp.ne.s32.totalorder %s141, %s142
      %p154 = scmp.eq.s32.totalorder %s27, 1
      %p155 = por %p153, %p154
      %p157 = scmp.ne.s32.totalorder %s142, %s156
      %p158 = scmp.eq.s32.totalorder %s27, 0
      %p159 = por %p157, %p158
      %s160 = ssub.s32 %s21, %s28
      %p161 = scmp.eq.s32.totalorder %s160, 0
      %s163 = sadd.s32 %s162, 1
      %s164 = scalar_select %p161, %s162, %s163
      %p167 = pneg %p161
      %p168 = scmp.eq.s32.totalorder %s21, 1
      %p169 = por %p167, %p168
      %p170 = scmp.ne.s32.totalorder %s162, %s165
      %p171 = scmp.eq.s32.totalorder %s21, 0
      %p172 = por %p170, %p171
      %p173 = scmp.ne.s32.totalorder %s162, %s165
      %p174 = scmp.eq.s32.totalorder %s26, 1
      %p175 = por %p173, %p174
      %p176 = scmp.ne.s32.totalorder %s165, %s166
      %p177 = scmp.eq.s32.totalorder %s26, 0
      %p178 = por %p176, %p177
      %p179 = scmp.ne.s32.totalorder %s165, %s166
      %p180 = scmp.eq.s32.totalorder %s27, 1
      %p181 = por %p179, %p180
      %p183 = scmp.ne.s32.totalorder %s166, %s182
      %p184 = scmp.eq.s32.totalorder %s27, 0
      %p185 = por %p183, %p184
      %s186 = ssub.s32 %s21, %s28
      %p187 = scmp.eq.s32.totalorder %s186, 0
      %s189 = sadd.s32 %s188, 1
      %s190 = scalar_select %p187, %s188, %s189
      %p193 = pneg %p187
      %p194 = scmp.eq.s32.totalorder %s21, 1
      %p195 = por %p193, %p194
      %p196 = scmp.ne.s32.totalorder %s188, %s191
      %p197 = scmp.eq.s32.totalorder %s21, 0
      %p198 = por %p196, %p197
      %p199 = scmp.ne.s32.totalorder %s188, %s191
      %p200 = scmp.eq.s32.totalorder %s26, 1
      %p201 = por %p199, %p200
      %p202 = scmp.ne.s32.totalorder %s191, %s192
      %p203 = scmp.eq.s32.totalorder %s26, 0
      %p204 = por %p202, %p203
      %p205 = scmp.ne.s32.totalorder %s191, %s192
      %p206 = scmp.eq.s32.totalorder %s27, 1
      %p207 = por %p205, %p206
      %p209 = scmp.ne.s32.totalorder %s192, %s208
      %p210 = scmp.eq.s32.totalorder %s27, 0
      %p211 = por %p209, %p210
      %s212 = ssub.s32 %s21, %s28
      %p213 = scmp.eq.s32.totalorder %s212, 0
      %s215 = sadd.s32 %s214, 1
      %s216 = scalar_select %p213, %s214, %s215
      %p219 = pneg %p213
      %p220 = scmp.eq.s32.totalorder %s21, 1
      %p221 = por %p219, %p220
      %p222 = scmp.ne.s32.totalorder %s214, %s217
      %p223 = scmp.eq.s32.totalorder %s21, 0
      %p224 = por %p222, %p223
      %p225 = scmp.ne.s32.totalorder %s214, %s217
      %p226 = scmp.eq.s32.totalorder %s26, 1
      %p227 = por %p225, %p226
      %p228 = scmp.ne.s32.totalorder %s217, %s218
      %p229 = scmp.eq.s32.totalorder %s26, 0
      %p230 = por %p228, %p229
      %p231 = scmp.ne.s32.totalorder %s217, %s218
      %p232 = scmp.eq.s32.totalorder %s27, 1
      %p233 = por %p231, %p232
      %p235 = scmp.ne.s32.totalorder %s218, %s234
      %p236 = scmp.eq.s32.totalorder %s27, 0
      %p237 = por %p235, %p236
      %p238 = scmp.le.s32.totalorder 1, %s21
      %p239 = scmp.lt.s32.totalorder %s21, 3
      %p240 = pnand %p238, %p239
      %p241 = pneg %p240
      // Predicated region
      $region9: #{brain_attention_model.1} parent=5 // pred_check
        _
      $region10: #{brain_attention_model.1} parent=5 // pred_check_branch
        %243 = sbr.rel (%p240) target = $region12
      $region11: #{brain_attention_model.1} parent=5 // pred_region
        %s244 = ssub.s32 %s21, 1
        // Predicated region
        $region13: #{brain_attention_model.1} parent=11 // pred_check
          %p245 = pneg %p68
        $region14: #{brain_attention_model.1} parent=11 // pred_check_branch
          %247 = sbr.rel (%p245) target = $region16
        $region15: #{brain_attention_model.1} parent=11 // pred_region
          _
        $region16: #{brain_attention_model.1} parent=11 // pred_fallthru
          _
        // Predicated region
        $region17: #{brain_attention_model.1} parent=11 // pred_check
          %p248 = pneg %p89
        $region18: #{brain_attention_model.1} parent=11 // pred_check_branch
          %250 = sbr.rel (%p248) target = $region20
        $region19: #{brain_attention_model.1} parent=11 // pred_region
          _
        $region20: #{brain_attention_model.1} parent=11 // pred_fallthru
          _
        // Predicated region
        $region21: #{brain_attention_model.1} parent=11 // pred_check
          %p251 = pneg %p110
        $region22: #{brain_attention_model.1} parent=11 // pred_check_branch
          %253 = sbr.rel (%p251) target = $region24
        $region23: #{brain_attention_model.1} parent=11 // pred_region
          _
        $region24: #{brain_attention_model.1} parent=11 // pred_fallthru
          _
        // Predicated region
        $region25: #{brain_attention_model.1} parent=11 // pred_check
          %p254 = pneg %p131
        $region26: #{brain_attention_model.1} parent=11 // pred_check_branch
          %256 = sbr.rel (%p254) target = $region28
        $region27: #{brain_attention_model.1} parent=11 // pred_region
          _
        $region28: #{brain_attention_model.1} parent=11 // pred_fallthru
          _
        // Predicated region
        $region29: #{brain_attention_model.1} parent=11 // pred_check
          %p257 = pneg %p152
        $region30: #{brain_attention_model.1} parent=11 // pred_check_branch
          %259 = sbr.rel (%p257) target = $region32
        $region31: #{brain_attention_model.1} parent=11 // pred_region
          _
        $region32: #{brain_attention_model.1} parent=11 // pred_fallthru
          _
      $region12: #{brain_attention_model.1} parent=5 // pred_fallthru
        _
      %p260 = scmp.lt.s32.totalorder %s21, 2
      // Predicated region
      $region33: #{brain_attention_model.1} parent=5 // pred_check
        %p261 = pneg %p260
      $region34: #{brain_attention_model.1} parent=5 // pred_check_branch
        %263 = sbr.rel (%p261) target = $region36
      $region35: #{brain_attention_model.1} parent=5 // pred_region
        // Predicated region
        $region37: #{brain_attention_model.1} parent=35 // pred_check
          %p264 = pneg %p41
        $region38: #{brain_attention_model.1} parent=35 // pred_check_branch
          %266 = sbr.rel (%p264) target = $region40
        $region39: #{brain_attention_model.1} parent=35 // pred_region
          %s267 = smul.u32 4, %s21
          %p268 = scmp.lt.s32.totalorder %s267, 7
          %s269 = scalar_select %p268, %s267, 7
          %s270 = smul.addr %s269, 8
          %s271 = scalar_lea.vmem %s0, %s270
          %s272 = smul.u32 4, %s21
        $region40: #{brain_attention_model.1} parent=35 // pred_fallthru
          _
      $region36: #{brain_attention_model.1} parent=5 // pred_fallthru
        _
      %p273 = scmp.le.s32.totalorder 1, %s21
      %p274 = scmp.lt.s32.totalorder %s21, 3
      %p275 = pnand %p273, %p274
      %p276 = pneg %p275
      // Predicated region
      $region41: #{brain_attention_model.1} parent=5 // pred_check
        _
      $region42: #{brain_attention_model.1} parent=5 // pred_check_branch
        %278 = sbr.rel (%p275) target = $region44
      $region43: #{brain_attention_model.1} parent=5 // pred_region
        %s279 = ssub.s32 %s21, 1
        %s280 = smul.u32 4, %s26
        %p281 = scmp.lt.s32.totalorder %s280, 7
        %s282 = scalar_select %p281, %s280, 7
        %s283 = smul.addr %s282, 8
        %s284 = scalar_lea.vmem %s0, %s283
        %p285 = pneg %p47
        %p286 = pneg %p44
        %p287 = pneg %p68
        %p288 = pneg %p65
        %p289 = pneg %p89
        %p290 = pneg %p86
        %p291 = pneg %p110
        %p292 = pneg %p107
        %p293 = pneg %p131
        %p294 = pneg %p128
        %p295 = pneg %p152
        %p296 = pneg %p149
        %p297 = pneg %p178
        %p298 = pneg %p175
        %s299 = sand.u32 %s165, 1
        %s300 = scalar_lea.sflag [#allocation3], %s299
        %s301 = sand.u32 %s165, 1
        %s302 = smul.addr %s301, 8
        %s303 = scalar_lea.vmem [#allocation2], %s302
        %p304 = pneg %p204
        %p305 = pneg %p201
        %s306 = sand.u32 %s26, 1
        %s307 = scalar_lea.sflag [#allocation5], %s306
        %s308 = sand.u32 %s191, 1
        %s309 = smul.addr %s308, 8
        %s310 = scalar_lea.vmem [#allocation4], %s309
        %p311 = pneg %p230
        %p312 = pneg %p227
        %s313 = sand.u32 %s26, 1
        %s314 = scalar_lea.sflag [#allocation5], %s313
        %s315 = sand.u32 %s217, 1
        %s316 = smul.addr %s315, 8
        %s317 = scalar_lea.vmem [#allocation6], %s316
        %s318 = smul.u32 4, %s26
        %p319 = scmp.lt.s32.totalorder %s318, 7
        %s320 = scalar_select %p319, %s318, 7
        %s321 = smul.addr %s320, 8
        %s322 = scalar_lea.vmem %s0, %s321
        %s323 = smul.u32 4, %s26
        %v324 = vld [vmem:[%s1] sm:$0xff]
        %v325 = vld [vmem:[%s322] sm:$0xff]
        %v326 = vld [vmem:[%s322 + $0x8] sm:$0xff]
        %v327 = vld [vmem:[%s322 + $0x10] sm:$0xff]
        %v328 = vld [vmem:[%s322 + $0x18] sm:$0xff]
        %v329 = vld [vmem:[%s3] sm:$0xff]
        %v330 = vld [vmem:[%s3 + $0x8] sm:$0xff]
        %v331 = vld [vmem:[%s3 + $0x10] sm:$0xff]
        %v332 = vld [vmem:[%s3 + $0x18] sm:$0xff]
        %v333 = vld [vmem:[%s5] sm:$0x1]
        %v334 = vlaneseq
        %v335 = vshrl.u32 %v334, 7
        %v336 = vsub.s32 0, %v335
        %v337 = vrot.slane %v333, %v336
        %vm338 = vcmask 261120
        %v340 = vsel %vm338, %v325, 0
        %v343 = vsel %vm338, %v326, 0
        %v346 = vsel %vm338, %v327, 0
        %v349 = vsel %vm338, %v328, 0
        %351 = vmatprep.subr.mxu0 0.0
        %352 = vmatpush1.msra.mxu0 %v329
        %353 = vmatprep.subr.mxu0 0.0
        %354 = vmatpush1.msra.mxu0 %v330
        %355 = vmatprep.subr.mxu0 0.0
        %356 = vmatpush1.msra.mxu0 %v331
        %357 = vmatprep.subr.mxu0 0.0
        %358 = vmatpush1.msra.mxu0 %v332
        %359 = vmatprep.subr.mxu0 0.0
        %360 = vmatpush1.msra.mxu0 0.0
        %361 = vmatprep.subr.mxu0 0.0
        %362 = vmatpush1.msra.mxu0 0.0
        %363 = vmatprep.subr.mxu0 0.0
        %364 = vmatpush1.msra.mxu0 0.0
        %365 = vmatprep.subr.mxu0 0.0
        %366 = vmatpush1.msra.mxu0 0.0
        %367 = vmatprep.subr.mxu0 0.0
        %368 = vmatpush1.msra.mxu0 0.0
        %369 = vmatprep.subr.mxu0 0.0
        %370 = vmatpush1.msra.mxu0 0.0
        %371 = vmatprep.subr.mxu0 0.0
        %372 = vmatpush1.msra.mxu0 0.0
        %373 = vmatprep.subr.mxu0 0.0
        %374 = vmatpush1.msra.mxu0 0.0
        %375 = vmatprep.subr.mxu0 0.0
        %376 = vmatpush1.msra.mxu0 0.0
        %377 = vmatprep.subr.mxu0 0.0
        %378 = vmatpush1.msra.mxu0 0.0
        %379 = vmatprep.subr.mxu0 0.0
        %380 = vmatpush1.msra.mxu0 0.0
        %381 = vmatprep.subr.mxu0 0.0
        %382 = vmatpush1.msra.mxu0 0.0
        %383 = vmatprep.subr.mxu0 0.0
        %384 = vmatpush1.msra.mxu0 0.0
        %385 = vmatprep.subr.mxu0 0.0
        %386 = vmatpush1.msra.mxu0 0.0
        %387 = vmatprep.subr.mxu0 0.0
        %388 = vmatpush1.msra.mxu0 0.0
        %389 = vmatprep.subr.mxu0 0.0
        %390 = vmatpush1.msra.mxu0 0.0
        %391 = vmatprep.subr.mxu0 0.0
        %392 = vmatpush1.msra.mxu0 0.0
        %393 = vmatprep.subr.mxu0 0.0
        %394 = vmatpush1.msra.mxu0 0.0
        %395 = vmatprep.subr.mxu0 0.0
        %396 = vmatpush1.msra.mxu0 0.0
        %397 = vmatprep.subr.mxu0 0.0
        %398 = vmatpush1.msra.mxu0 0.0
        %399 = vmatprep.subr.mxu0 0.0
        %400 = vmatpush1.msra.mxu0 0.0
        %401 = vmatprep.subr.mxu0 0.0
        %402 = vmatpush1.msra.mxu0 0.0
        %403 = vmatprep.subr.mxu0 0.0
        %404 = vmatpush1.msra.mxu0 0.0
        %405 = vmatprep.subr.mxu0 0.0
        %406 = vmatpush1.msra.mxu0 0.0
        %407 = vmatprep.subr.mxu0 0.0
        %408 = vmatpush1.msra.mxu0 0.0
        %409 = vmatprep.subr.mxu0 0.0
        %410 = vmatpush1.msra.mxu0 0.0
        %411 = vmatprep.subr.mxu0 0.0
        %412 = vmatpush1.msra.mxu0 0.0
        %413 = vmatprep.subr.mxu0 0.0
        %414 = vmatpush1.msra.mxu0 0.0
        %415 = vmatprep.mubr.f32.mxu0 0.0
        %416 = vmatmul.mubr.f32.gmra.mrb[0].mxu0 %v340
        %v417 = vpop.f32.mrb[0].mxu0
        %v418 = vadd.f32 %v337, %v417
        %v419 = vpop.f32.mrb[0].mxu0
        %420 = vmatprep.mubr.f32.mxu0 0.0
        %421 = vmatmul.mubr.f32.gmra.mrb[0].mxu0 %v343
        %v422 = vpop.f32.mrb[0].mxu0
        %v423 = vadd.f32 %v337, %v422
        %v424 = vpop.f32.mrb[0].mxu0
        %425 = vmatprep.mubr.f32.mxu0 0.0
        %426 = vmatmul.mubr.f32.gmra.mrb[0].mxu0 %v346
        %v427 = vpop.f32.mrb[0].mxu0
        %v428 = vadd.f32 %v337, %v427
        %v429 = vpop.f32.mrb[0].mxu0
        %430 = vmatprep.mubr.f32.mxu0 0.0
        %431 = vmatmul.mubr.f32.gmra.mrb[0].mxu0 %v349
        %v432 = vpop.f32.mrb[0].mxu0
        %v433 = vadd.f32 %v337, %v432
        %v434 = vpop.f32.mrb[0].mxu0
        %435 = vdwg.mxu0
        %v436 = vld [vmem:[%s2] sm:$0xff]
        %v437 = vld [vmem:[%s2 + $0x8] sm:$0xff]
        %v439 = vsel %vm338, %v436, 0
        %v442 = vsel %vm338, %v437, 0
        %v445 = vsel %vm338, %v418, 0
        %v448 = vsel %vm338, %v423, 0
        %v451 = vsel %vm338, %v428, 0
        %v454 = vsel %vm338, %v433, 0
        %456 = vmatprep.subr.mxu0 0.0
        %457 = vmatpush1.xpose.msra.mxu0 %v445
        %458 = vmatprep.subr.mxu0 0.0
        %459 = vmatpush1.xpose.msra.mxu0 %v448
        %460 = vmatprep.subr.mxu0 0.0
        %461 = vmatpush1.xpose.msra.mxu0 %v451
        %462 = vmatprep.subr.mxu0 0.0
        %463 = vmatpush1.xpose.msra.mxu0 %v454
        %464 = vmatprep.subr.mxu0 0.0
        %465 = vmatpush1.xpose.msra.mxu0 0.0
        %466 = vmatprep.subr.mxu0 0.0
        %467 = vmatpush1.xpose.msra.mxu0 0.0
        %468 = vmatprep.subr.mxu0 0.0
        %469 = vmatpush1.xpose.msra.mxu0 0.0
        %470 = vmatprep.subr.mxu0 0.0
        %471 = vmatpush1.xpose.msra.mxu0 0.0
        %472 = vmatprep.subr.mxu0 0.0
        %473 = vmatpush1.xpose.msra.mxu0 0.0
        %474 = vmatprep.subr.mxu0 0.0
        %475 = vmatpush1.xpose.msra.mxu0 0.0
        %476 = vmatprep.subr.mxu0 0.0
        %477 = vmatpush1.xpose.msra.mxu0 0.0
        %478 = vmatprep.subr.mxu0 0.0
        %479 = vmatpush1.xpose.msra.mxu0 0.0
        %480 = vmatprep.subr.mxu0 0.0
        %481 = vmatpush1.xpose.msra.mxu0 0.0
        %482 = vmatprep.subr.mxu0 0.0
        %483 = vmatpush1.xpose.msra.mxu0 0.0
        %484 = vmatprep.subr.mxu0 0.0
        %485 = vmatpush1.xpose.msra.mxu0 0.0
        %486 = vmatprep.subr.mxu0 0.0
        %487 = vmatpush1.xpose.msra.mxu0 0.0
        %488 = vmatprep.subr.mxu0 0.0
        %489 = vmatpush1.xpose.msra.mxu0 0.0
        %490 = vmatprep.subr.mxu0 0.0
        %491 = vmatpush1.xpose.msra.mxu0 0.0
        %492 = vmatprep.subr.mxu0 0.0
        %493 = vmatpush1.xpose.msra.mxu0 0.0
        %494 = vmatprep.subr.mxu0 0.0
        %495 = vmatpush1.xpose.msra.mxu0 0.0
        %496 = vmatprep.subr.mxu0 0.0
        %497 = vmatpush1.xpose.msra.mxu0 0.0
        %498 = vmatprep.subr.mxu0 0.0
        %499 = vmatpush1.xpose.msra.mxu0 0.0
        %500 = vmatprep.subr.mxu0 0.0
        %501 = vmatpush1.xpose.msra.mxu0 0.0
        %502 = vmatprep.subr.mxu0 0.0
        %503 = vmatpush1.xpose.msra.mxu0 0.0
        %504 = vmatprep.subr.mxu0 0.0
        %505 = vmatpush1.xpose.msra.mxu0 0.0
        %506 = vmatprep.subr.mxu0 0.0
        %507 = vmatpush1.xpose.msra.mxu0 0.0
        %508 = vmatprep.subr.mxu0 0.0
        %509 = vmatpush1.xpose.msra.mxu0 0.0
        %510 = vmatprep.subr.mxu0 0.0
        %511 = vmatpush1.xpose.msra.mxu0 0.0
        %512 = vmatprep.subr.mxu0 0.0
        %513 = vmatpush1.xpose.msra.mxu0 0.0
        %514 = vmatprep.subr.mxu0 0.0
        %515 = vmatpush1.xpose.msra.mxu0 0.0
        %516 = vmatprep.subr.mxu0 0.0
        %517 = vmatpush1.xpose.msra.mxu0 0.0
        %518 = vmatprep.subr.mxu0 0.0
        %519 = vmatpush1.xpose.msra.mxu0 0.0
        %520 = vmatprep.mubr.f32.mxu0 0.0
        %521 = vmatmul.mubr.f32.gmra.mrb[0].mxu0 %v439
        %v522 = vpop.f32.mrb[0].mxu0
        %v523 = vadd.f32 0.0, %v522
        %v524 = vpop.f32.mrb[0].mxu0
        %525 = vmatprep.mubr.f32.mxu0 0.0
        %526 = vmatmul.mubr.f32.gmra.mrb[0].mxu0 %v442
        %v527 = vpop.f32.mrb[0].mxu0
        %v528 = vadd.f32 0.0, %v527
        %v529 = vpop.f32.mrb[0].mxu0
        %530 = vdwg.mxu0
        %v531 = vsel %vm338, %v523, -inf
        %532 = vmax.xlane.f32.xlu0 %v531
        %v533 = vpop.xlane.xlu0 %532
        %v534 = vsel %vm338, %v528, -inf
        %535 = vmax.xlane.f32.xlu0 %v534
        %v536 = vpop.xlane.xlu0 %535
        %v537 = vsub.f32 %v523, %v533
        %v538 = vsub.f32 %v528, %v536
        %v539 = vmul.f32 %v537, 1.442695
        %v540 = vpow.pop %v539
        %v541 = vmul.f32 %v538, 1.442695
        %v542 = vpow.pop %v541
        %v543 = vsel %vm338, %v540, 0.0
        %544 = vadd.xlane.f32.xlu0 %v543
        %v545 = vpop.xlane.xlu0 %544
        %v546 = vsel %vm338, %v542, 0.0
        %547 = vadd.xlane.f32.xlu0 %v546
        %v548 = vpop.xlane.xlu0 %547
        %v549 = vrcp.pop %v545
        %v550 = vrcp.pop %v548
        %v551 = vmul.f32 %v545, %v549
        %v552 = vmul.f32 %v548, %v550
        %v553 = vsub.f32 2.0, %v551
        %v554 = vsub.f32 2.0, %v552
        %v555 = vmul.f32 %v549, %v553
        %v556 = vmul.f32 %v550, %v554
        %v557 = vmul.f32 %v540, %v555
        %v558 = vmul.f32 %v542, %v556
        %559 = vrot.lane.b32.xlu0 %v418, 96
        %v560 = vpop.permute.xlu0 %559
        %561 = vrot.lane.b32.xlu0 %v423, 96
        %v562 = vpop.permute.xlu0 %561
        %563 = vrot.lane.b32.xlu0 %v428, 96
        %v564 = vpop.permute.xlu0 %563
        %565 = vrot.lane.b32.xlu0 %v433, 96
        %v566 = vpop.permute.xlu0 %565
        %v572 = vsel %vm338, %v557, 0
        %v575 = vsel %vm338, %v558, 0
        %577 = vmatprep.subr.mxu0 0.0
        %578 = vmatpush1.msra.mxu0 %v560
        %579 = vmatprep.subr.mxu0 0.0
        %580 = vmatpush1.msra.mxu0 %v562
        %581 = vmatprep.subr.mxu0 0.0
        %582 = vmatpush1.msra.mxu0 %v564
        %583 = vmatprep.subr.mxu0 0.0
        %584 = vmatpush1.msra.mxu0 %v566
        %585 = vmatprep.subr.mxu0 0.0
        %586 = vmatpush1.msra.mxu0 0.0
        %587 = vmatprep.subr.mxu0 0.0
        %588 = vmatpush1.msra.mxu0 0.0
        %589 = vmatprep.subr.mxu0 0.0
        %590 = vmatpush1.msra.mxu0 0.0
        %591 = vmatprep.subr.mxu0 0.0
        %592 = vmatpush1.msra.mxu0 0.0
        %593 = vmatprep.subr.mxu0 0.0
        %594 = vmatpush1.msra.mxu0 0.0
        %595 = vmatprep.subr.mxu0 0.0
        %596 = vmatpush1.msra.mxu0 0.0
        %597 = vmatprep.subr.mxu0 0.0
        %598 = vmatpush1.msra.mxu0 0.0
        %599 = vmatprep.subr.mxu0 0.0
        %600 = vmatpush1.msra.mxu0 0.0
        %601 = vmatprep.subr.mxu0 0.0
        %602 = vmatpush1.msra.mxu0 0.0
        %603 = vmatprep.subr.mxu0 0.0
        %604 = vmatpush1.msra.mxu0 0.0
        %605 = vmatprep.subr.mxu0 0.0
        %606 = vmatpush1.msra.mxu0 0.0
        %607 = vmatprep.subr.mxu0 0.0
        %608 = vmatpush1.msra.mxu0 0.0
        %609 = vmatprep.subr.mxu0 0.0
        %610 = vmatpush1.msra.mxu0 0.0
        %611 = vmatprep.subr.mxu0 0.0
        %612 = vmatpush1.msra.mxu0 0.0
        %613 = vmatprep.subr.mxu0 0.0
        %614 = vmatpush1.msra.mxu0 0.0
        %615 = vmatprep.subr.mxu0 0.0
        %616 = vmatpush1.msra.mxu0 0.0
        %617 = vmatprep.subr.mxu0 0.0
        %618 = vmatpush1.msra.mxu0 0.0
        %619 = vmatprep.subr.mxu0 0.0
        %620 = vmatpush1.msra.mxu0 0.0
        %621 = vmatprep.subr.mxu0 0.0
        %622 = vmatpush1.msra.mxu0 0.0
        %623 = vmatprep.subr.mxu0 0.0
        %624 = vmatpush1.msra.mxu0 0.0
        %625 = vmatprep.subr.mxu0 0.0
        %626 = vmatpush1.msra.mxu0 0.0
        %627 = vmatprep.subr.mxu0 0.0
        %628 = vmatpush1.msra.mxu0 0.0
        %629 = vmatprep.subr.mxu0 0.0
        %630 = vmatpush1.msra.mxu0 0.0
        %631 = vmatprep.subr.mxu0 0.0
        %632 = vmatpush1.msra.mxu0 0.0
        %633 = vmatprep.subr.mxu0 0.0
        %634 = vmatpush1.msra.mxu0 0.0
        %635 = vmatprep.subr.mxu0 0.0
        %636 = vmatpush1.msra.mxu0 0.0
        %637 = vmatprep.subr.mxu0 0.0
        %638 = vmatpush1.msra.mxu0 0.0
        %639 = vmatprep.subr.mxu0 0.0
        %640 = vmatpush1.msra.mxu0 0.0
        %641 = vmatprep.mubr.f32.mxu0 0.0
        %642 = vmatmul.mubr.f32.gmra.mrb[0].mxu0 %v572
        %v643 = vpop.f32.mrb[0].mxu0
        %v644 = vadd.f32 0.0, %v643
        %v645 = vpop.f32.mrb[0].mxu0
        %646 = vmatprep.mubr.f32.mxu0 0.0
        %647 = vmatmul.mubr.f32.gmra.mrb[0].mxu0 %v575
        %v648 = vpop.f32.mrb[0].mxu0
        %v649 = vadd.f32 0.0, %v648
        %v650 = vpop.f32.mrb[0].mxu0
        %651 = vdwg.mxu0
        %653 = vrot.lane.b32.xlu0 %v649, 32
        %v654 = vpop.permute.xlu0 %653
        %v656 = vsel %vm338, %v644, %v654
        %v657 = vld [vmem:[%s4] sm:$0xff]
        %v658 = vld [vmem:[%s4 + $0x8] sm:$0xff]
        %v659 = vld [vmem:[%s4 + $0x10] sm:$0xff]
        %v660 = vld [vmem:[%s4 + $0x18] sm:$0xff]
        %v661 = vld [vmem:[%s4 + $0x20] sm:$0xff]
        %v662 = vld [vmem:[%s4 + $0x28] sm:$0xff]
        %v663 = vld [vmem:[%s4 + $0x30] sm:$0xff]
        %v664 = vld [vmem:[%s4 + $0x38] sm:$0xff]
        %v665 = vld [vmem:[%s5 + $0x1] sm:$0x1]
        %v666 = vlaneseq
        %v667 = vshrl.u32 %v666, 7
        %v668 = vsub.s32 0, %v667
        %v669 = vrot.slane %v665, %v668
        %vm670 = vcmask 523264
        %v672 = vsel %vm670, %v656, 0
        %674 = vmatprep.subr.mxu0 0.0
        %675 = vmatpush1.msra.mxu0 %v657
        %676 = vmatprep.subr.mxu0 0.0
        %677 = vmatpush1.msra.mxu0 %v658
        %678 = vmatprep.subr.mxu0 0.0
        %679 = vmatpush1.msra.mxu0 %v659
        %680 = vmatprep.subr.mxu0 0.0
        %681 = vmatpush1.msra.mxu0 %v660
        %682 = vmatprep.subr.mxu0 0.0
        %683 = vmatpush1.msra.mxu0 %v661
        %684 = vmatprep.subr.mxu0 0.0
        %685 = vmatpush1.msra.mxu0 %v662
        %686 = vmatprep.subr.mxu0 0.0
        %687 = vmatpush1.msra.mxu0 %v663
        %688 = vmatprep.subr.mxu0 0.0
        %689 = vmatpush1.msra.mxu0 %v664
        %690 = vmatprep.subr.mxu0 0.0
        %691 = vmatpush1.msra.mxu0 0.0
        %692 = vmatprep.subr.mxu0 0.0
        %693 = vmatpush1.msra.mxu0 0.0
        %694 = vmatprep.subr.mxu0 0.0
        %695 = vmatpush1.msra.mxu0 0.0
        %696 = vmatprep.subr.mxu0 0.0
        %697 = vmatpush1.msra.mxu0 0.0
        %698 = vmatprep.subr.mxu0 0.0
        %699 = vmatpush1.msra.mxu0 0.0
        %700 = vmatprep.subr.mxu0 0.0
        %701 = vmatpush1.msra.mxu0 0.0
        %702 = vmatprep.subr.mxu0 0.0
        %703 = vmatpush1.msra.mxu0 0.0
        %704 = vmatprep.subr.mxu0 0.0
        %705 = vmatpush1.msra.mxu0 0.0
        %706 = vmatprep.subr.mxu0 0.0
        %707 = vmatpush1.msra.mxu0 0.0
        %708 = vmatprep.subr.mxu0 0.0
        %709 = vmatpush1.msra.mxu0 0.0
        %710 = vmatprep.subr.mxu0 0.0
        %711 = vmatpush1.msra.mxu0 0.0
        %712 = vmatprep.subr.mxu0 0.0
        %713 = vmatpush1.msra.mxu0 0.0
        %714 = vmatprep.subr.mxu0 0.0
        %715 = vmatpush1.msra.mxu0 0.0
        %716 = vmatprep.subr.mxu0 0.0
        %717 = vmatpush1.msra.mxu0 0.0
        %718 = vmatprep.subr.mxu0 0.0
        %719 = vmatpush1.msra.mxu0 0.0
        %720 = vmatprep.subr.mxu0 0.0
        %721 = vmatpush1.msra.mxu0 0.0
        %722 = vmatprep.subr.mxu0 0.0
        %723 = vmatpush1.msra.mxu0 0.0
        %724 = vmatprep.subr.mxu0 0.0
        %725 = vmatpush1.msra.mxu0 0.0
        %726 = vmatprep.subr.mxu0 0.0
        %727 = vmatpush1.msra.mxu0 0.0
        %728 = vmatprep.subr.mxu0 0.0
        %729 = vmatpush1.msra.mxu0 0.0
        %730 = vmatprep.subr.mxu0 0.0
        %731 = vmatpush1.msra.mxu0 0.0
        %732 = vmatprep.subr.mxu0 0.0
        %733 = vmatpush1.msra.mxu0 0.0
        %734 = vmatprep.subr.mxu0 0.0
        %735 = vmatpush1.msra.mxu0 0.0
        %736 = vmatprep.subr.mxu0 0.0
        %737 = vmatpush1.msra.mxu0 0.0
        %738 = vmatprep.mubr.f32.mxu0 0.0
        %739 = vmatmul.mubr.f32.gmra.mrb[0].mxu0 %v672
        %v740 = vpop.f32.mrb[0].mxu0
        %v741 = vadd.f32 %v669, %v740
        %v742 = vpop.f32.mrb[0].mxu0
        %743 = vdwg.mxu0
        %v744 = vadd.f32 %v741, %v324
        %v745 = vsel %vm338, %v744, 0.0
        %746 = vadd.xlane.f32.xlu0 %v745
        %v747 = vpop.xlane.xlu0 %746
        %v748 = vrcp.pop 32.0
        %v749 = vmul.f32 %v747, %v748
        %v750 = vsub.f32 %v744, %v749
        %v751 = vmul.f32 %v750, %v750
        %v752 = vsel %vm338, %v751, 0.0
        %753 = vadd.xlane.f32.xlu0 %v752
        %v754 = vpop.xlane.xlu0 %753
        %v755 = vmul.f32 %v754, %v748
        %v756 = vadd.f32 %v755, 1e-05
        %v757 = vrsqrt.pop %v756
        %v758 = vmul.f32 %v750, %v757
        %v759 = vld [vmem:[%s5 + $0x2] sm:$0x1]
        %v760 = vlaneseq
        %v761 = vshrl.u32 %v760, 7
        %v762 = vsub.s32 0, %v761
        %v763 = vrot.slane %v759, %v762
        %v764 = vmul.f32 %v758, %v763
        %v765 = vld [vmem:[%s5 + $0x3] sm:$0x1]
        %v766 = vlaneseq
        %v767 = vshrl.u32 %v766, 7
        %v768 = vsub.s32 0, %v767
        %v769 = vrot.slane %v765, %v768
        %v770 = vadd.f32 %v764, %v769
        %v771 = vadd.f32 %v557, %v558
        %v772 = vmul.f32 %v771, 0.5
        %773 = vst.msk [vmem:[%s310] sm:$0xff] %vm338, %v772
        %s774 = scalar_lea.vmem %s3, 32
        %v775 = vld [vmem:[%s774] sm:$0xff]
        %v776 = vld [vmem:[%s774 + $0x8] sm:$0xff]
        %v777 = vld [vmem:[%s774 + $0x10] sm:$0xff]
        %v778 = vld [vmem:[%s774 + $0x18] sm:$0xff]
        %s779 = scalar_lea.vmem %s5, 4
        %v780 = vld [vmem:[%s779] sm:$0x1]
        %v781 = vlaneseq
        %v782 = vshrl.u32 %v781, 7
        %v783 = vsub.s32 0, %v782
        %v784 = vrot.slane %v780, %v783
        %v786 = vsel %vm338, %v770, 0
        %788 = vmatprep.subr.mxu0 0.0
        %789 = vmatpush1.msra.mxu0 %v775
        %790 = vmatprep.subr.mxu0 0.0
        %791 = vmatpush1.msra.mxu0 %v776
        %792 = vmatprep.subr.mxu0 0.0
        %793 = vmatpush1.msra.mxu0 %v777
        %794 = vmatprep.subr.mxu0 0.0
        %795 = vmatpush1.msra.mxu0 %v778
        %796 = vmatprep.subr.mxu0 0.0
        %797 = vmatpush1.msra.mxu0 0.0
        %798 = vmatprep.subr.mxu0 0.0
        %799 = vmatpush1.msra.mxu0 0.0
        %800 = vmatprep.subr.mxu0 0.0
        %801 = vmatpush1.msra.mxu0 0.0
        %802 = vmatprep.subr.mxu0 0.0
        %803 = vmatpush1.msra.mxu0 0.0
        %804 = vmatprep.subr.mxu0 0.0
        %805 = vmatpush1.msra.mxu0 0.0
        %806 = vmatprep.subr.mxu0 0.0
        %807 = vmatpush1.msra.mxu0 0.0
        %808 = vmatprep.subr.mxu0 0.0
        %809 = vmatpush1.msra.mxu0 0.0
        %810 = vmatprep.subr.mxu0 0.0
        %811 = vmatpush1.msra.mxu0 0.0
        %812 = vmatprep.subr.mxu0 0.0
        %813 = vmatpush1.msra.mxu0 0.0
        %814 = vmatprep.subr.mxu0 0.0
        %815 = vmatpush1.msra.mxu0 0.0
        %816 = vmatprep.subr.mxu0 0.0
        %817 = vmatpush1.msra.mxu0 0.0
        %818 = vmatprep.subr.mxu0 0.0
        %819 = vmatpush1.msra.mxu0 0.0
        %820 = vmatprep.subr.mxu0 0.0
        %821 = vmatpush1.msra.mxu0 0.0
        %822 = vmatprep.subr.mxu0 0.0
        %823 = vmatpush1.msra.mxu0 0.0
        %824 = vmatprep.subr.mxu0 0.0
        %825 = vmatpush1.msra.mxu0 0.0
        %826 = vmatprep.subr.mxu0 0.0
        %827 = vmatpush1.msra.mxu0 0.0
        %828 = vmatprep.subr.mxu0 0.0
        %829 = vmatpush1.msra.mxu0 0.0
        %830 = vmatprep.subr.mxu0 0.0
        %831 = vmatpush1.msra.mxu0 0.0
        %832 = vmatprep.subr.mxu0 0.0
        %833 = vmatpush1.msra.mxu0 0.0
        %834 = vmatprep.subr.mxu0 0.0
        %835 = vmatpush1.msra.mxu0 0.0
        %836 = vmatprep.subr.mxu0 0.0
        %837 = vmatpush1.msra.mxu0 0.0
        %838 = vmatprep.subr.mxu0 0.0
        %839 = vmatpush1.msra.mxu0 0.0
        %840 = vmatprep.subr.mxu0 0.0
        %841 = vmatpush1.msra.mxu0 0.0
        %842 = vmatprep.subr.mxu0 0.0
        %843 = vmatpush1.msra.mxu0 0.0
        %844 = vmatprep.subr.mxu0 0.0
        %845 = vmatpush1.msra.mxu0 0.0
        %846 = vmatprep.subr.mxu0 0.0
        %847 = vmatpush1.msra.mxu0 0.0
        %848 = vmatprep.subr.mxu0 0.0
        %849 = vmatpush1.msra.mxu0 0.0
        %850 = vmatprep.subr.mxu0 0.0
        %851 = vmatpush1.msra.mxu0 0.0
        %852 = vmatprep.mubr.f32.mxu0 0.0
        %853 = vmatmul.mubr.f32.gmra.mrb[0].mxu0 %v786
        %v854 = vpop.f32.mrb[0].mxu0
        %v855 = vadd.f32 %v784, %v854
        %v856 = vpop.f32.mrb[0].mxu0
        %857 = vdwg.mxu0
        %s858 = scalar_lea.vmem %s2, 16
        %v859 = vld [vmem:[%s858] sm:$0xff]
        %v860 = vld [vmem:[%s858 + $0x8] sm:$0xff]
        %v862 = vsel %vm338, %v859, 0
        %v865 = vsel %vm338, %v860, 0
        %v868 = vsel %vm338, %v855, 0
        %870 = vmatprep.subr.mxu0 0.0
        %871 = vmatpush1.xpose.msra.mxu0 %v868
        %872 = vmatprep.subr.mxu0 0.0
        %873 = vmatpush1.xpose.msra.mxu0 0.0
        %874 = vmatprep.subr.mxu0 0.0
        %875 = vmatpush1.xpose.msra.mxu0 0.0
        %876 = vmatprep.subr.mxu0 0.0
        %877 = vmatpush1.xpose.msra.mxu0 0.0
        %878 = vmatprep.subr.mxu0 0.0
        %879 = vmatpush1.xpose.msra.mxu0 0.0
        %880 = vmatprep.subr.mxu0 0.0
        %881 = vmatpush1.xpose.msra.mxu0 0.0
        %882 = vmatprep.subr.mxu0 0.0
        %883 = vmatpush1.xpose.msra.mxu0 0.0
        %884 = vmatprep.subr.mxu0 0.0
        %885 = vmatpush1.xpose.msra.mxu0 0.0
        %886 = vmatprep.subr.mxu0 0.0
        %887 = vmatpush1.xpose.msra.mxu0 0.0
        %888 = vmatprep.subr.mxu0 0.0
        %889 = vmatpush1.xpose.msra.mxu0 0.0
        %890 = vmatprep.subr.mxu0 0.0
        %891 = vmatpush1.xpose.msra.mxu0 0.0
        %892 = vmatprep.subr.mxu0 0.0
        %893 = vmatpush1.xpose.msra.mxu0 0.0
        %894 = vmatprep.subr.mxu0 0.0
        %895 = vmatpush1.xpose.msra.mxu0 0.0
        %896 = vmatprep.subr.mxu0 0.0
        %897 = vmatpush1.xpose.msra.mxu0 0.0
        %898 = vmatprep.subr.mxu0 0.0
        %899 = vmatpush1.xpose.msra.mxu0 0.0
        %900 = vmatprep.subr.mxu0 0.0
        %901 = vmatpush1.xpose.msra.mxu0 0.0
        %902 = vmatprep.subr.mxu0 0.0
        %903 = vmatpush1.xpose.msra.mxu0 0.0
        %904 = vmatprep.subr.mxu0 0.0
        %905 = vmatpush1.xpose.msra.mxu0 0.0
        %906 = vmatprep.subr.mxu0 0.0
        %907 = vmatpush1.xpose.msra.mxu0 0.0
        %908 = vmatprep.subr.mxu0 0.0
        %909 = vmatpush1.xpose.msra.mxu0 0.0
        %910 = vmatprep.subr.mxu0 0.0
        %911 = vmatpush1.xpose.msra.mxu0 0.0
        %912 = vmatprep.subr.mxu0 0.0
        %913 = vmatpush1.xpose.msra.mxu0 0.0
        %914 = vmatprep.subr.mxu0 0.0
        %915 = vmatpush1.xpose.msra.mxu0 0.0
        %916 = vmatprep.subr.mxu0 0.0
        %917 = vmatpush1.xpose.msra.mxu0 0.0
        %918 = vmatprep.subr.mxu0 0.0
        %919 = vmatpush1.xpose.msra.mxu0 0.0
        %920 = vmatprep.subr.mxu0 0.0
        %921 = vmatpush1.xpose.msra.mxu0 0.0
        %922 = vmatprep.subr.mxu0 0.0
        %923 = vmatpush1.xpose.msra.mxu0 0.0
        %924 = vmatprep.subr.mxu0 0.0
        %925 = vmatpush1.xpose.msra.mxu0 0.0
        %926 = vmatprep.subr.mxu0 0.0
        %927 = vmatpush1.xpose.msra.mxu0 0.0
        %928 = vmatprep.subr.mxu0 0.0
        %929 = vmatpush1.xpose.msra.mxu0 0.0
        %930 = vmatprep.subr.mxu0 0.0
        %931 = vmatpush1.xpose.msra.mxu0 0.0
        %932 = vmatprep.subr.mxu0 0.0
        %933 = vmatpush1.xpose.msra.mxu0 0.0
        %934 = vmatprep.mubr.f32.mxu0 0.0
        %935 = vmatmul.mubr.f32.gmra.mrb[0].mxu0 %v862
        %v936 = vpop.f32.mrb[0].mxu0
        %v937 = vadd.f32 0.0, %v936
        %v938 = vpop.f32.mrb[0].mxu0
        %939 = vmatprep.mubr.f32.mxu0 0.0
        %940 = vmatmul.mubr.f32.gmra.mrb[0].mxu0 %v865
        %v941 = vpop.f32.mrb[0].mxu0
        %v942 = vadd.f32 0.0, %v941
        %v943 = vpop.f32.mrb[0].mxu0
        %944 = vdwg.mxu0
        %vm945 = vcmask 64512
        %v946 = vsel %vm945, %v937, -inf
        %947 = vmax.xlane.f32.xlu0 %v946
        %v948 = vpop.xlane.xlu0 %947
        %v949 = vsel %vm945, %v942, -inf
        %950 = vmax.xlane.f32.xlu0 %v949
        %v951 = vpop.xlane.xlu0 %950
        %v952 = vsub.f32 %v937, %v948
        %v953 = vsub.f32 %v942, %v951
        %v954 = vmul.f32 %v952, 1.442695
        %v955 = vpow.pop %v954
        %v956 = vmul.f32 %v953, 1.442695
        %v957 = vpow.pop %v956
        %v958 = vsel %vm945, %v955, 0.0
        %959 = vadd.xlane.f32.xlu0 %v958
        %v960 = vpop.xlane.xlu0 %959
        %v961 = vsel %vm945, %v957, 0.0
        %962 = vadd.xlane.f32.xlu0 %v961
        %v963 = vpop.xlane.xlu0 %962
        %v964 = vrcp.pop %v960
        %v965 = vrcp.pop %v963
        %v966 = vmul.f32 %v960, %v964
        %v967 = vmul.f32 %v963, %v965
        %v968 = vsub.f32 2.0, %v966
        %v969 = vsub.f32 2.0, %v967
        %v970 = vmul.f32 %v964, %v968
        %v971 = vmul.f32 %v965, %v969
        %v972 = vmul.f32 %v955, %v970
        %v973 = vmul.f32 %v957, %v971
        %974 = vrot.lane.b32.xlu0 %v855, 96
        %v975 = vpop.permute.xlu0 %974
        %v978 = vsel %vm945, %v972, 0
        %v981 = vsel %vm945, %v973, 0
        %983 = vmatprep.subr.mxu0 0.0
        %984 = vmatpush1.msra.mxu0 %v975
        %985 = vmatprep.subr.mxu0 0.0
        %986 = vmatpush1.msra.mxu0 0.0
        %987 = vmatprep.subr.mxu0 0.0
        %988 = vmatpush1.msra.mxu0 0.0
        %989 = vmatprep.subr.mxu0 0.0
        %990 = vmatpush1.msra.mxu0 0.0
        %991 = vmatprep.subr.mxu0 0.0
        %992 = vmatpush1.msra.mxu0 0.0
        %993 = vmatprep.subr.mxu0 0.0
        %994 = vmatpush1.msra.mxu0 0.0
        %995 = vmatprep.subr.mxu0 0.0
        %996 = vmatpush1.msra.mxu0 0.0
        %997 = vmatprep.subr.mxu0 0.0
        %998 = vmatpush1.msra.mxu0 0.0
        %999 = vmatprep.subr.mxu0 0.0
        %1000 = vmatpush1.msra.mxu0 0.0
        %1001 = vmatprep.subr.mxu0 0.0
        %1002 = vmatpush1.msra.mxu0 0.0
        %1003 = vmatprep.subr.mxu0 0.0
        %1004 = vmatpush1.msra.mxu0 0.0
        %1005 = vmatprep.subr.mxu0 0.0
        %1006 = vmatpush1.msra.mxu0 0.0
        %1007 = vmatprep.subr.mxu0 0.0
        %1008 = vmatpush1.msra.mxu0 0.0
        %1009 = vmatprep.subr.mxu0 0.0
        %1010 = vmatpush1.msra.mxu0 0.0
        %1011 = vmatprep.subr.mxu0 0.0
        %1012 = vmatpush1.msra.mxu0 0.0
        %1013 = vmatprep.subr.mxu0 0.0
        %1014 = vmatpush1.msra.mxu0 0.0
        %1015 = vmatprep.subr.mxu0 0.0
        %1016 = vmatpush1.msra.mxu0 0.0
        %1017 = vmatprep.subr.mxu0 0.0
        %1018 = vmatpush1.msra.mxu0 0.0
        %1019 = vmatprep.subr.mxu0 0.0
        %1020 = vmatpush1.msra.mxu0 0.0
        %1021 = vmatprep.subr.mxu0 0.0
        %1022 = vmatpush1.msra.mxu0 0.0
        %1023 = vmatprep.subr.mxu0 0.0
        %1024 = vmatpush1.msra.mxu0 0.0
        %1025 = vmatprep.subr.mxu0 0.0
        %1026 = vmatpush1.msra.mxu0 0.0
        %1027 = vmatprep.subr.mxu0 0.0
        %1028 = vmatpush1.msra.mxu0 0.0
        %1029 = vmatprep.subr.mxu0 0.0
        %1030 = vmatpush1.msra.mxu0 0.0
        %1031 = vmatprep.subr.mxu0 0.0
        %1032 = vmatpush1.msra.mxu0 0.0
        %1033 = vmatprep.subr.mxu0 0.0
        %1034 = vmatpush1.msra.mxu0 0.0
        %1035 = vmatprep.subr.mxu0 0.0
        %1036 = vmatpush1.msra.mxu0 0.0
        %1037 = vmatprep.subr.mxu0 0.0
        %1038 = vmatpush1.msra.mxu0 0.0
        %1039 = vmatprep.subr.mxu0 0.0
        %1040 = vmatpush1.msra.mxu0 0.0
        %1041 = vmatprep.subr.mxu0 0.0
        %1042 = vmatpush1.msra.mxu0 0.0
        %1043 = vmatprep.subr.mxu0 0.0
        %1044 = vmatpush1.msra.mxu0 0.0
        %1045 = vmatprep.subr.mxu0 0.0
        %1046 = vmatpush1.msra.mxu0 0.0
        %1047 = vmatprep.mubr.f32.mxu0 0.0
        %1048 = vmatmul.mubr.f32.gmra.mrb[0].mxu0 %v978
        %v1049 = vpop.f32.mrb[0].mxu0
        %v1050 = vadd.f32 0.0, %v1049
        %v1051 = vpop.f32.mrb[0].mxu0
        %1052 = vmatprep.mubr.f32.mxu0 0.0
        %1053 = vmatmul.mubr.f32.gmra.mrb[0].mxu0 %v981
        %v1054 = vpop.f32.mrb[0].mxu0
        %v1055 = vadd.f32 0.0, %v1054
        %v1056 = vpop.f32.mrb[0].mxu0
        %1057 = vdwg.mxu0
        %1059 = vrot.lane.b32.xlu0 %v1055, 32
        %v1060 = vpop.permute.xlu0 %1059
        %v1062 = vsel %vm338, %v1050, %v1060
        %s1063 = scalar_lea.vmem %s4, 64
        %v1064 = vld [vmem:[%s1063] sm:$0xff]
        %v1065 = vld [vmem:[%s1063 + $0x8] sm:$0xff]
        %v1066 = vld [vmem:[%s1063 + $0x10] sm:$0xff]
        %v1067 = vld [vmem:[%s1063 + $0x18] sm:$0xff]
        %v1068 = vld [vmem:[%s1063 + $0x20] sm:$0xff]
        %v1069 = vld [vmem:[%s1063 + $0x28] sm:$0xff]
        %v1070 = vld [vmem:[%s1063 + $0x30] sm:$0xff]
        %v1071 = vld [vmem:[%s1063 + $0x38] sm:$0xff]
        %v1072 = vld [vmem:[%s779 + $0x1] sm:$0x1]
        %v1073 = vlaneseq
        %v1074 = vshrl.u32 %v1073, 7
        %v1075 = vsub.s32 0, %v1074
        %v1076 = vrot.slane %v1072, %v1075
        %v1078 = vsel %vm670, %v1062, 0
        %1080 = vmatprep.subr.mxu0 0.0
        %1081 = vmatpush1.msra.mxu0 %v1064
        %1082 = vmatprep.subr.mxu0 0.0
        %1083 = vmatpush1.msra.mxu0 %v1065
        %1084 = vmatprep.subr.mxu0 0.0
        %1085 = vmatpush1.msra.mxu0 %v1066
        %1086 = vmatprep.subr.mxu0 0.0
        %1087 = vmatpush1.msra.mxu0 %v1067
        %1088 = vmatprep.subr.mxu0 0.0
        %1089 = vmatpush1.msra.mxu0 %v1068
        %1090 = vmatprep.subr.mxu0 0.0
        %1091 = vmatpush1.msra.mxu0 %v1069
        %1092 = vmatprep.subr.mxu0 0.0
        %1093 = vmatpush1.msra.mxu0 %v1070
        %1094 = vmatprep.subr.mxu0 0.0
        %1095 = vmatpush1.msra.mxu0 %v1071
        %1096 = vmatprep.subr.mxu0 0.0
        %1097 = vmatpush1.msra.mxu0 0.0
        %1098 = vmatprep.subr.mxu0 0.0
        %1099 = vmatpush1.msra.mxu0 0.0
        %1100 = vmatprep.subr.mxu0 0.0
        %1101 = vmatpush1.msra.mxu0 0.0
        %1102 = vmatprep.subr.mxu0 0.0
        %1103 = vmatpush1.msra.mxu0 0.0
        %1104 = vmatprep.subr.mxu0 0.0
        %1105 = vmatpush1.msra.mxu0 0.0
        %1106 = vmatprep.subr.mxu0 0.0
        %1107 = vmatpush1.msra.mxu0 0.0
        %1108 = vmatprep.subr.mxu0 0.0
        %1109 = vmatpush1.msra.mxu0 0.0
        %1110 = vmatprep.subr.mxu0 0.0
        %1111 = vmatpush1.msra.mxu0 0.0
        %1112 = vmatprep.subr.mxu0 0.0
        %1113 = vmatpush1.msra.mxu0 0.0
        %1114 = vmatprep.subr.mxu0 0.0
        %1115 = vmatpush1.msra.mxu0 0.0
        %1116 = vmatprep.subr.mxu0 0.0
        %1117 = vmatpush1.msra.mxu0 0.0
        %1118 = vmatprep.subr.mxu0 0.0
        %1119 = vmatpush1.msra.mxu0 0.0
        %1120 = vmatprep.subr.mxu0 0.0
        %1121 = vmatpush1.msra.mxu0 0.0
        %1122 = vmatprep.subr.mxu0 0.0
        %1123 = vmatpush1.msra.mxu0 0.0
        %1124 = vmatprep.subr.mxu0 0.0
        %1125 = vmatpush1.msra.mxu0 0.0
        %1126 = vmatprep.subr.mxu0 0.0
        %1127 = vmatpush1.msra.mxu0 0.0
        %1128 = vmatprep.subr.mxu0 0.0
        %1129 = vmatpush1.msra.mxu0 0.0
        %1130 = vmatprep.subr.mxu0 0.0
        %1131 = vmatpush1.msra.mxu0 0.0
        %1132 = vmatprep.subr.mxu0 0.0
        %1133 = vmatpush1.msra.mxu0 0.0
        %1134 = vmatprep.subr.mxu0 0.0
        %1135 = vmatpush1.msra.mxu0 0.0
        %1136 = vmatprep.subr.mxu0 0.0
        %1137 = vmatpush1.msra.mxu0 0.0
        %1138 = vmatprep.subr.mxu0 0.0
        %1139 = vmatpush1.msra.mxu0 0.0
        %1140 = vmatprep.subr.mxu0 0.0
        %1141 = vmatpush1.msra.mxu0 0.0
        %1142 = vmatprep.subr.mxu0 0.0
        %1143 = vmatpush1.msra.mxu0 0.0
        %1144 = vmatprep.mubr.f32.mxu0 0.0
        %1145 = vmatmul.mubr.f32.gmra.mrb[0].mxu0 %v1078
        %v1146 = vpop.f32.mrb[0].mxu0
        %v1147 = vadd.f32 %v1076, %v1146
        %v1148 = vpop.f32.mrb[0].mxu0
        %1149 = vdwg.mxu0
        %v1150 = vadd.f32 %v1147, %v324
        %v1151 = vsel %vm338, %v1150, 0.0
        %1152 = vadd.xlane.f32.xlu0 %v1151
        %v1153 = vpop.xlane.xlu0 %1152
        %v1154 = vmul.f32 %v1153, %v748
        %v1155 = vsub.f32 %v1150, %v1154
        %v1156 = vmul.f32 %v1155, %v1155
        %v1157 = vsel %vm338, %v1156, 0.0
        %1158 = vadd.xlane.f32.xlu0 %v1157
        %v1159 = vpop.xlane.xlu0 %1158
        %v1160 = vmul.f32 %v1159, %v748
        %v1161 = vadd.f32 %v1160, 1e-05
        %v1162 = vrsqrt.pop %v1161
        %v1163 = vmul.f32 %v1155, %v1162
        %v1164 = vld [vmem:[%s779 + $0x2] sm:$0x1]
        %v1165 = vlaneseq
        %v1166 = vshrl.u32 %v1165, 7
        %v1167 = vsub.s32 0, %v1166
        %v1168 = vrot.slane %v1164, %v1167
        %v1169 = vmul.f32 %v1163, %v1168
        %v1170 = vld [vmem:[%s779 + $0x3] sm:$0x1]
        %v1171 = vlaneseq
        %v1172 = vshrl.u32 %v1171, 7
        %v1173 = vsub.s32 0, %v1172
        %v1174 = vrot.slane %v1170, %v1173
        %v1175 = vadd.f32 %v1169, %v1174
        %v1176 = vadd.f32 %v972, %v973
        %v1177 = vmul.f32 %v1176, 0.5
        %1178 = vst.msk [vmem:[%s317] sm:$0xff] %vm945, %v1177
        %1179 = vst.msk [vmem:[%s303] sm:$0xff] %vm338, %v1175
        %s1180 = sand.u32 %s165, 1
        %s1181 = scalar_lea.sflag [#allocation3], %s1180
        %s1182 = sand.u32 %s165, 1
        %s1183 = smul.addr %s1182, 8
        %s1184 = scalar_lea.vmem [#allocation2], %s1183
        %s1185 = sand.u32 %s26, 1
        %s1186 = scalar_lea.sflag [#allocation5], %s1185
        %s1187 = sand.u32 %s191, 1
        %s1188 = smul.addr %s1187, 8
        %s1189 = scalar_lea.vmem [#allocation4], %s1188
        %s1190 = sand.u32 %s26, 1
        %s1191 = scalar_lea.sflag [#allocation5], %s1190
        %s1192 = sand.u32 %s217, 1
        %s1193 = smul.addr %s1192, 8
        %s1194 = scalar_lea.vmem [#allocation6], %s1193
        // Predicated region
        $region45: #{brain_attention_model.1} parent=43 // pred_check
          %p1195 = pneg %p175
        $region46: #{brain_attention_model.1} parent=43 // pred_check_branch
          %1197 = sbr.rel (%p1195) target = $region48
        $region47: #{brain_attention_model.1} parent=43 // pred_region
          %s1199 = ssub.s32 128, 128
          %1200 = vsyncadd %s1181, %s1199
          %s1201 = smul.addr %s26, 128
          %s1202 = scalar_lea.hbm %s6, %s1201
          %s1204 = sshll.u32 %s1184, 4
          %s1205 = int_to_ptr.vmem [resolvable:$true] %s1204
          %1207 = dma.vmem_to_hbm [thread:$0]  %s1205, 128, %s1202, %s1181
        $region48: #{brain_attention_model.1} parent=43 // pred_fallthru
          _
        // Predicated region
        $region49: #{brain_attention_model.1} parent=43 // pred_check
          %p1208 = pneg %p201
        $region50: #{brain_attention_model.1} parent=43 // pred_check_branch
          %1210 = sbr.rel (%p1208) target = $region52
        $region51: #{brain_attention_model.1} parent=43 // pred_region
          %s1212 = ssub.s32 128, 128
          %1213 = vsyncadd %s1186, %s1212
          %s1214 = smul.addr %s26, 128
          %s1215 = scalar_lea.hbm %s7, %s1214
          %s1217 = sshll.u32 %s1189, 4
          %s1218 = int_to_ptr.vmem [resolvable:$true] %s1217
          %1220 = dma.vmem_to_hbm [thread:$0]  %s1218, 128, %s1215, %s1186
        $region52: #{brain_attention_model.1} parent=43 // pred_fallthru
          _
        // Predicated region
        $region53: #{brain_attention_model.1} parent=43 // pred_check
          %p1221 = pneg %p227
        $region54: #{brain_attention_model.1} parent=43 // pred_check_branch
          %1223 = sbr.rel (%p1221) target = $region56
        $region55: #{brain_attention_model.1} parent=43 // pred_region
          %s1225 = ssub.s32 128, 128
          %1226 = vsyncadd %s1191, %s1225
          %s1227 = smul.addr %s26, 128
          %s1228 = scalar_lea.hbm %s8, %s1227
          %s1230 = sshll.u32 %s1194, 4
          %s1231 = int_to_ptr.vmem [resolvable:$true] %s1230
          %1233 = dma.vmem_to_hbm [thread:$0]  %s1231, 128, %s1228, %s1191
        $region56: #{brain_attention_model.1} parent=43 // pred_fallthru
          _
      $region44: #{brain_attention_model.1} parent=5 // pred_fallthru
        _
      %p1234 = scmp.le.s32.totalorder 2, %s21
      // Predicated region
      $region57: #{brain_attention_model.1} parent=5 // pred_check
        %p1235 = pneg %p1234
      $region58: #{brain_attention_model.1} parent=5 // pred_check_branch
        %1237 = sbr.rel (%p1235) target = $region60
      $region59: #{brain_attention_model.1} parent=5 // pred_region
        %s1238 = ssub.s32 %s21, 2
        // Predicated region
        $region61: #{brain_attention_model.1} parent=59 // pred_check
          %p1239 = pneg %p181
        $region62: #{brain_attention_model.1} parent=59 // pred_check_branch
          %1241 = sbr.rel (%p1239) target = $region64
        $region63: #{brain_attention_model.1} parent=59 // pred_region
          %s1242 = sand.u32 %s166, 1
          %s1243 = scalar_lea.sflag [#allocation3], %s1242
          %s1244 = sand.u32 %s166, 1
          %s1245 = smul.addr %s1244, 8
          %s1246 = scalar_lea.vmem [#allocation2], %s1245
          %1247 = dma.done %s1243, 128
        $region64: #{brain_attention_model.1} parent=59 // pred_fallthru
          _
        // Predicated region
        $region65: #{brain_attention_model.1} parent=59 // pred_check
          %p1248 = pneg %p207
        $region66: #{brain_attention_model.1} parent=59 // pred_check_branch
          %1250 = sbr.rel (%p1248) target = $region68
        $region67: #{brain_attention_model.1} parent=59 // pred_region
          %s1251 = sand.u32 %s27, 1
          %s1252 = scalar_lea.sflag [#allocation5], %s1251
          %s1253 = sand.u32 %s192, 1
          %s1254 = smul.addr %s1253, 8
          %s1255 = scalar_lea.vmem [#allocation4], %s1254
          %1256 = dma.done %s1252, 128
        $region68: #{brain_attention_model.1} parent=59 // pred_fallthru
          _
        // Predicated region
        $region69: #{brain_attention_model.1} parent=59 // pred_check
          %p1257 = pneg %p233
        $region70: #{brain_attention_model.1} parent=59 // pred_check_branch
          %1259 = sbr.rel (%p1257) target = $region72
        $region71: #{brain_attention_model.1} parent=59 // pred_region
          %s1260 = sand.u32 %s27, 1
          %s1261 = scalar_lea.sflag [#allocation5], %s1260
          %s1262 = sand.u32 %s218, 1
          %s1263 = smul.addr %s1262, 8
          %s1264 = scalar_lea.vmem [#allocation6], %s1263
          %1265 = dma.done %s1261, 128
        $region72: #{brain_attention_model.1} parent=59 // pred_fallthru
          _
      $region60: #{brain_attention_model.1} parent=5 // pred_fallthru
        _
    $region6: #{brain_attention_model.1} parent=1 // loop_footer
      %s25 = sadd.s32 1, %s21
    $region7: #{brain_attention_model.1} parent=1 // loop_footer_branch
      %20 = sbr.rel target = $region3
    $region8: #{brain_attention_model.1} parent=1 // loop_exit
      _
    %1266 = vsyncpa [#allocation3], 1
    %s1267 = scalar_lea.sflag [#allocation3], 1
    %1268 = vsyncpa %s1267, 1
    %1269 = vsyncpa [#allocation5], 1
    %s1270 = scalar_lea.sflag [#allocation5], 1
    %1271 = vsyncpa %s1270, 1

</llo_original>
